<compile_context>
chip_gen: v5e
topology: v5e:2x2
jax: 0.10.0
libtpu: 0.0.40
codegen_flags: <defaults>
</compile_context>

<pallas_src>
import functools

import jax
import jax.numpy as jnp
from jax.experimental import pallas as pl
from jax.experimental.pallas import tpu as pltpu

W5 = 512              # hidden width from the PyTorch module (w5 = 512)
CODEBOOK_SIZE = 512   # VectorQuantize(codebook_size=512)
MAX_TB = 256          # batch-tile rows (fills MXU M-dim, bounds VMEM on v7x)


# ---------------------------------------------------------------------------
# Fused kernel: encoder -> vector-quantize -> decoder, one batch tile per step.
# ---------------------------------------------------------------------------
def _fused_kernel(x_ref, w1_ref, b1_ref, w2_ref, b2_ref,
                  bd_ref, cc_ref, bdc_ref,
                  w3_ref, b3_ref, w4_ref, b4_ref,
                  out_ref, loss_ref,
                  *, nvq, codebook_size):
    K = codebook_size
    TB = x_ref.shape[0]

    # ---- encoder: relu(l1) -> relu(l2) -> z (TB, nvq*D), kept in vregs -----
    x = x_ref[...]
    h1 = jnp.dot(x, w1_ref[...], preferred_element_type=jnp.float32) + b1_ref[...]
    h1 = jnp.maximum(h1, 0.0)
    z = jnp.dot(h1, w2_ref[...], preferred_element_type=jnp.float32) + b2_ref[...]
    z = jnp.maximum(z, 0.0)

    # ---- vector quantization (all groups fused) -----------------------------
    # score[:, g*K + k] = |c_k|^2 - 2 * <z_g, c_k>   (the per-row |z_g|^2 term
    # is constant within a group, so it is omitted: argmin is unchanged).
    score = jnp.dot(z, bd_ref[...], preferred_element_type=jnp.float32) + cc_ref[...]

    iota = jax.lax.broadcasted_iota(jnp.int32, (TB, K), 1)     # hoisted once
    onehots = []
    for g in range(nvq):                         # nvq is small & static; only
        s_g = score[:, g * K:(g + 1) * K]        # cheap min/compare per group
        s_min = jnp.min(s_g, axis=-1, keepdims=True)
        idx = jnp.min(jnp.where(s_g == s_min, iota, K),
                      axis=-1, keepdims=True)    # first-occurrence argmin
        onehots.append((iota == idx).astype(jnp.float32))
    onehot = jnp.concatenate(onehots, axis=-1)                  # (TB, nvq*K)

    # one gather matmul against block_diag(codebook): q is (TB, nvq*D), i.e.
    # already in the layout the decoder wants (straight-through forward value).
    q = jnp.dot(onehot, bdc_ref[...], preferred_element_type=jnp.float32)

    # per-row commitment-loss partial sums; mean is finished in the wrapper.
    diff = q - z
    loss_ref[...] = jnp.sum(diff * diff, axis=-1, keepdims=True)    # (TB, 1)
    # TODO(synk): EMA codebook update (decay=0.8) of EuclideanCodebook is a
    # training-time side effect and is not replicated here.

    # ---- decoder: relu(l3) -> l4 (lane-dense output) -------------------------
    h3 = jnp.dot(q, w3_ref[...], preferred_element_type=jnp.float32) + b3_ref[...]
    h3 = jnp.maximum(h3, 0.0)
    out_ref[...] = (jnp.dot(h3, w4_ref[...], preferred_element_type=jnp.float32)
                    + b4_ref[...])


# ---------------------------------------------------------------------------
# pallas_call wrapper: parallel batch grid, weights VMEM-resident across steps
# ---------------------------------------------------------------------------
def neural_network6_forward(x, params, *, input_dim, bottle_dim, seq, nvq):
    B = x.shape[0]
    din = input_dim * seq
    dbn = bottle_dim * nvq
    K = CODEBOOK_SIZE

    x2d = x.reshape(B, din)                  # same order as torch.reshape(...)

    TB = B if B <= MAX_TB else MAX_TB
    num_tiles = pl.cdiv(B, TB)
    b_pad = num_tiles * TB
    if b_pad != B:
        x2d = jnp.pad(x2d, ((0, b_pad - B), (0, 0)))

    def _resident(shape):                     # whole array, fetched once
        return pl.BlockSpec(shape, lambda i: (0, 0))

    param_order = ("w1", "b1", "w2", "b2",
                   "neg2_codebook_bd", "codebook_sq_tiled", "codebook_bd",
                   "w3", "b3", "w4", "b4")
    param_args = [params[k] for k in param_order]

    flops = 2 * b_pad * (din * W5 + W5 * dbn + dbn * (nvq * K)
                         + (nvq * K) * dbn + dbn * W5 + W5 * din)
    bytes_accessed = 4 * (x2d.size + b_pad * din + b_pad
                          + sum(int(p.size) for p in param_args))

    kernel = functools.partial(_fused_kernel, nvq=nvq, codebook_size=K)
    out, row_sq = pl.pallas_call(
        kernel,
        grid=(num_tiles,),
        out_shape=(jax.ShapeDtypeStruct((b_pad, din), jnp.float32),
                   jax.ShapeDtypeStruct((b_pad, 1), jnp.float32)),
        in_specs=[pl.BlockSpec((TB, din), lambda i: (i, 0))]
                 + [_resident(p.shape) for p in param_args],
        out_specs=(pl.BlockSpec((TB, din), lambda i: (i, 0)),
                   pl.BlockSpec((TB, 1), lambda i: (i, 0))),
        compiler_params=pltpu.CompilerParams(
            dimension_semantics=("parallel",)),
        cost_estimate=pl.CostEstimate(flops=int(flops), transcendentals=0,
                                      bytes_accessed=int(bytes_accessed)),
    )(x2d, *param_args)

    # commitment_weight = 1.0, mse over all (B * nvq * bottle_dim) elements.
    commit_loss = jnp.sum(row_sq[:B, 0]) / float(B * nvq * bottle_dim)
    return out[:B].reshape(B, seq, input_dim), commit_loss


# ---------------------------------------------------------------------------
# Parameter setup (block-diagonal / -2-scaled codebook matrices hoisted here)
# ---------------------------------------------------------------------------
def init_params(key, input_dim, bottle_dim, seq, nvq):
    din = input_dim * seq
    dbn = bottle_dim * nvq
    ks = jax.random.split(key, 9)
    s = 0.05
    codebook = jax.random.normal(ks[4], (CODEBOOK_SIZE, bottle_dim), jnp.float32)

    # block_diag(-2 * C^T) : (nvq*D, nvq*K) -- one matmul gives all groups'
    # -2<z_g, c_k> scores.  block_diag(C) : (nvq*K, nvq*D) for the gather.
    neg2_cbt = (-2.0 * codebook.T).astype(jnp.float32)
    neg2_codebook_bd = jax.scipy.linalg.block_diag(*([neg2_cbt] * nvq))
    codebook_bd = jax.scipy.linalg.block_diag(*([codebook] * nvq))
    codebook_sq_tiled = jnp.tile(jnp.sum(codebook * codebook, axis=-1)[None, :],
                                 (1, nvq))                      # (1, nvq*K)

    return dict(
        w1=jax.random.normal(ks[0], (din, W5), jnp.float32) * s,
        b1=jax.random.normal(ks[1], (1, W5), jnp.float32) * s,
        w2=jax.random.normal(ks[2], (W5, dbn), jnp.float32) * s,
        b2=jax.random.normal(ks[3], (1, dbn), jnp.float32) * s,
        neg2_codebook_bd=neg2_codebook_bd,          # (nvq*D, nvq*K)
        codebook_sq_tiled=codebook_sq_tiled,        # (1, nvq*K)
        codebook_bd=codebook_bd,                    # (nvq*K, nvq*D)
        w3=jax.random.normal(ks[5], (dbn, W5), jnp.float32) * s,
        b3=jax.random.normal(ks[6], (1, W5), jnp.float32) * s,
        w4=jax.random.normal(ks[7], (W5, din), jnp.float32) * s,
        b4=jax.random.normal(ks[8], (1, din), jnp.float32) * s,
    )


if __name__ == "__main__":
    # small shapes consistent with the module
    input_dim, bottle_dim, seq, nvq = 16, 8, 8, 4
    B = 2

    key = jax.random.PRNGKey(0)
    kx, kp = jax.random.split(key)
    x = jax.random.normal(kx, (B, seq, input_dim), jnp.float32)
    params = init_params(kp, input_dim, bottle_dim, seq, nvq)

    fwd = jax.jit(lambda xx: neural_network6_forward(
        xx, params, input_dim=input_dim, bottle_dim=bottle_dim, seq=seq, nvq=nvq))
    out, commit_loss = fwd(x)
    jax.block_until_ready((out, commit_loss))

    assert out.shape == (B, seq, input_dim)
    assert commit_loss.shape == ()
    assert bool(jnp.isfinite(commit_loss))
    assert bool(jnp.all(jnp.isfinite(out)))
    print("KERNEL_OK")
</pallas_src>

<mosaic_0001>
module attributes {stable_mosaic.version = 11 : i64} {
  func.func @_fused_kernel(%arg0: i32, %arg1: memref<2x128xf32, #tpu.memory_space<vmem>>, %arg2: memref<128x512xf32, #tpu.memory_space<vmem>>, %arg3: memref<1x512xf32, #tpu.memory_space<vmem>>, %arg4: memref<512x32xf32, #tpu.memory_space<vmem>>, %arg5: memref<1x32xf32, #tpu.memory_space<vmem>>, %arg6: memref<32x2048xf32, #tpu.memory_space<vmem>>, %arg7: memref<1x2048xf32, #tpu.memory_space<vmem>>, %arg8: memref<2048x32xf32, #tpu.memory_space<vmem>>, %arg9: memref<32x512xf32, #tpu.memory_space<vmem>>, %arg10: memref<1x512xf32, #tpu.memory_space<vmem>>, %arg11: memref<512x128xf32, #tpu.memory_space<vmem>>, %arg12: memref<1x128xf32, #tpu.memory_space<vmem>>, %arg13: memref<2x128xf32, #tpu.memory_space<vmem>>, %arg14: memref<2x1xf32, #tpu.memory_space<vmem>>) attributes {dimension_semantics = [#tpu.dimension_semantics<parallel>], iteration_bounds = array<i64: 1>, scalar_prefetch = 0 : i64, scratch_operands = 0 : i64, tpu.core_type = #tpu.core_type<tc>, window_params = [{transform_indices = @transform_0, window_bounds = array<i64: 2, 128>}, {pipeline_mode = #tpu.pipeline_mode<synchronous>, transform_indices = @transform_1, window_bounds = array<i64: 128, 512>}, {pipeline_mode = #tpu.pipeline_mode<synchronous>, transform_indices = @transform_2, window_bounds = array<i64: 1, 512>}, {pipeline_mode = #tpu.pipeline_mode<synchronous>, transform_indices = @transform_3, window_bounds = array<i64: 512, 32>}, {pipeline_mode = #tpu.pipeline_mode<synchronous>, transform_indices = @transform_4, window_bounds = array<i64: 1, 32>}, {pipeline_mode = #tpu.pipeline_mode<synchronous>, transform_indices = @transform_5, window_bounds = array<i64: 32, 2048>}, {pipeline_mode = #tpu.pipeline_mode<synchronous>, transform_indices = @transform_6, window_bounds = array<i64: 1, 2048>}, {pipeline_mode = #tpu.pipeline_mode<synchronous>, transform_indices = @transform_7, window_bounds = array<i64: 2048, 32>}, {pipeline_mode = #tpu.pipeline_mode<synchronous>, transform_indices = @transform_8, window_bounds = array<i64: 32, 512>}, {pipeline_mode = #tpu.pipeline_mode<synchronous>, transform_indices = @transform_9, window_bounds = array<i64: 1, 512>}, {pipeline_mode = #tpu.pipeline_mode<synchronous>, transform_indices = @transform_10, window_bounds = array<i64: 512, 128>}, {pipeline_mode = #tpu.pipeline_mode<synchronous>, transform_indices = @transform_11, window_bounds = array<i64: 1, 128>}, {transform_indices = @transform_12, window_bounds = array<i64: 2, 128>}, {transform_indices = @transform_13, window_bounds = array<i64: 2, 1>}]} {
    %c0 = arith.constant 0 : index
    %c0_0 = arith.constant 0 : index
    %0 = vector.load %arg1[%c0, %c0_0] : memref<2x128xf32, #tpu.memory_space<vmem>>, vector<2x128xf32>
    %c0_1 = arith.constant 0 : index
    %c0_2 = arith.constant 0 : index
    %1 = vector.load %arg2[%c0_1, %c0_2] : memref<128x512xf32, #tpu.memory_space<vmem>>, vector<128x512xf32>
    %cst = arith.constant dense<0.000000e+00> : vector<2x512xf32>
    %2 = tpu.matmul %0, %1, %cst {dimension_numbers = #tpu.dot_dimension_numbers<[1], [0], [0], [1], [0, 0, 1, 1], [], []>} : vector<2x128xf32>, vector<128x512xf32>, vector<2x512xf32> -> vector<2x512xf32>
    %c0_3 = arith.constant 0 : index
    %c0_4 = arith.constant 0 : index
    %3 = vector.load %arg3[%c0_3, %c0_4] : memref<1x512xf32, #tpu.memory_space<vmem>>, vector<1x512xf32>
    %4 = vector.broadcast %3 : vector<1x512xf32> to vector<2x512xf32>
    %5 = arith.addf %2, %4 : vector<2x512xf32>
    %cst_5 = arith.constant 0.000000e+00 : f32
    %6 = vector.broadcast %cst_5 : f32 to vector<2x512xf32>
    %7 = arith.maximumf %5, %6 : vector<2x512xf32>
    %c0_6 = arith.constant 0 : index
    %c0_7 = arith.constant 0 : index
    %8 = vector.load %arg4[%c0_6, %c0_7] : memref<512x32xf32, #tpu.memory_space<vmem>>, vector<512x32xf32>
    %cst_8 = arith.constant dense<0.000000e+00> : vector<2x32xf32>
    %9 = tpu.matmul %7, %8, %cst_8 {dimension_numbers = #tpu.dot_dimension_numbers<[1], [0], [0], [1], [0, 0, 1, 1], [], []>} : vector<2x512xf32>, vector<512x32xf32>, vector<2x32xf32> -> vector<2x32xf32>
    %c0_9 = arith.constant 0 : index
    %c0_10 = arith.constant 0 : index
    %10 = vector.load %arg5[%c0_9, %c0_10] : memref<1x32xf32, #tpu.memory_space<vmem>>, vector<1x32xf32>
    %11 = vector.broadcast %10 : vector<1x32xf32> to vector<2x32xf32>
    %12 = arith.addf %9, %11 : vector<2x32xf32>
    %cst_11 = arith.constant 0.000000e+00 : f32
    %13 = vector.broadcast %cst_11 : f32 to vector<2x32xf32>
    %14 = arith.maximumf %12, %13 : vector<2x32xf32>
    %c0_12 = arith.constant 0 : index
    %c0_13 = arith.constant 0 : index
    %15 = vector.load %arg6[%c0_12, %c0_13] : memref<32x2048xf32, #tpu.memory_space<vmem>>, vector<32x2048xf32>
    %cst_14 = arith.constant dense<0.000000e+00> : vector<2x2048xf32>
    %16 = tpu.matmul %14, %15, %cst_14 {dimension_numbers = #tpu.dot_dimension_numbers<[1], [0], [0], [1], [0, 0, 1, 1], [], []>} : vector<2x32xf32>, vector<32x2048xf32>, vector<2x2048xf32> -> vector<2x2048xf32>
    %c0_15 = arith.constant 0 : index
    %c0_16 = arith.constant 0 : index
    %17 = vector.load %arg7[%c0_15, %c0_16] : memref<1x2048xf32, #tpu.memory_space<vmem>>, vector<1x2048xf32>
    %18 = vector.broadcast %17 : vector<1x2048xf32> to vector<2x2048xf32>
    %19 = arith.addf %16, %18 : vector<2x2048xf32>
    %20 = tpu.iota {dimensions = array<i32: 1>} : vector<2x512xi32>
    %21 = vector.extract_strided_slice %19 {offsets = [0, 0], sizes = [2, 512], strides = [1, 1]} : vector<2x2048xf32> to vector<2x512xf32>
    %cst_17 = arith.constant dense<0x7F800000> : vector<2xf32>
    %22 = vector.multi_reduction <minimumf>, %21, %cst_17 [1] : vector<2x512xf32> to vector<2xf32>
    %23 = vector.shape_cast %22 : vector<2xf32> to vector<2x1xf32>
    %24 = vector.broadcast %23 : vector<2x1xf32> to vector<2x512xf32>
    %25 = arith.cmpf oeq, %21, %24 : vector<2x512xf32>
    %c512_i32 = arith.constant 512 : i32
    %26 = vector.broadcast %c512_i32 : i32 to vector<2x512xi32>
    %27 = arith.select %25, %20, %26 : vector<2x512xi1>, vector<2x512xi32>
    %cst_18 = arith.constant dense<2147483647> : vector<2xi32>
    %28 = vector.multi_reduction <minsi>, %27, %cst_18 [1] : vector<2x512xi32> to vector<2xi32>
    %29 = vector.shape_cast %28 : vector<2xi32> to vector<2x1xi32>
    %30 = vector.broadcast %29 : vector<2x1xi32> to vector<2x512xi32>
    %31 = arith.cmpi eq, %20, %30 : vector<2x512xi32>
    %32 = arith.extui %31 : vector<2x512xi1> to vector<2x512xi32>
    %33 = arith.sitofp %32 : vector<2x512xi32> to vector<2x512xf32>
    %34 = vector.extract_strided_slice %19 {offsets = [0, 512], sizes = [2, 512], strides = [1, 1]} : vector<2x2048xf32> to vector<2x512xf32>
    %cst_19 = arith.constant dense<0x7F800000> : vector<2xf32>
    %35 = vector.multi_reduction <minimumf>, %34, %cst_19 [1] : vector<2x512xf32> to vector<2xf32>
    %36 = vector.shape_cast %35 : vector<2xf32> to vector<2x1xf32>
    %37 = vector.broadcast %36 : vector<2x1xf32> to vector<2x512xf32>
    %38 = arith.cmpf oeq, %34, %37 : vector<2x512xf32>
    %c512_i32_20 = arith.constant 512 : i32
    %39 = vector.broadcast %c512_i32_20 : i32 to vector<2x512xi32>
    %40 = arith.select %38, %20, %39 : vector<2x512xi1>, vector<2x512xi32>
    %cst_21 = arith.constant dense<2147483647> : vector<2xi32>
    %41 = vector.multi_reduction <minsi>, %40, %cst_21 [1] : vector<2x512xi32> to vector<2xi32>
    %42 = vector.shape_cast %41 : vector<2xi32> to vector<2x1xi32>
    %43 = vector.broadcast %42 : vector<2x1xi32> to vector<2x512xi32>
    %44 = arith.cmpi eq, %20, %43 : vector<2x512xi32>
    %45 = arith.extui %44 : vector<2x512xi1> to vector<2x512xi32>
    %46 = arith.sitofp %45 : vector<2x512xi32> to vector<2x512xf32>
    %47 = vector.extract_strided_slice %19 {offsets = [0, 1024], sizes = [2, 512], strides = [1, 1]} : vector<2x2048xf32> to vector<2x512xf32>
    %cst_22 = arith.constant dense<0x7F800000> : vector<2xf32>
    %48 = vector.multi_reduction <minimumf>, %47, %cst_22 [1] : vector<2x512xf32> to vector<2xf32>
    %49 = vector.shape_cast %48 : vector<2xf32> to vector<2x1xf32>
    %50 = vector.broadcast %49 : vector<2x1xf32> to vector<2x512xf32>
    %51 = arith.cmpf oeq, %47, %50 : vector<2x512xf32>
    %c512_i32_23 = arith.constant 512 : i32
    %52 = vector.broadcast %c512_i32_23 : i32 to vector<2x512xi32>
    %53 = arith.select %51, %20, %52 : vector<2x512xi1>, vector<2x512xi32>
    %cst_24 = arith.constant dense<2147483647> : vector<2xi32>
    %54 = vector.multi_reduction <minsi>, %53, %cst_24 [1] : vector<2x512xi32> to vector<2xi32>
    %55 = vector.shape_cast %54 : vector<2xi32> to vector<2x1xi32>
    %56 = vector.broadcast %55 : vector<2x1xi32> to vector<2x512xi32>
    %57 = arith.cmpi eq, %20, %56 : vector<2x512xi32>
    %58 = arith.extui %57 : vector<2x512xi1> to vector<2x512xi32>
    %59 = arith.sitofp %58 : vector<2x512xi32> to vector<2x512xf32>
    %60 = vector.extract_strided_slice %19 {offsets = [0, 1536], sizes = [2, 512], strides = [1, 1]} : vector<2x2048xf32> to vector<2x512xf32>
    %cst_25 = arith.constant dense<0x7F800000> : vector<2xf32>
    %61 = vector.multi_reduction <minimumf>, %60, %cst_25 [1] : vector<2x512xf32> to vector<2xf32>
    %62 = vector.shape_cast %61 : vector<2xf32> to vector<2x1xf32>
    %63 = vector.broadcast %62 : vector<2x1xf32> to vector<2x512xf32>
    %64 = arith.cmpf oeq, %60, %63 : vector<2x512xf32>
    %c512_i32_26 = arith.constant 512 : i32
    %65 = vector.broadcast %c512_i32_26 : i32 to vector<2x512xi32>
    %66 = arith.select %64, %20, %65 : vector<2x512xi1>, vector<2x512xi32>
    %cst_27 = arith.constant dense<2147483647> : vector<2xi32>
    %67 = vector.multi_reduction <minsi>, %66, %cst_27 [1] : vector<2x512xi32> to vector<2xi32>
    %68 = vector.shape_cast %67 : vector<2xi32> to vector<2x1xi32>
    %69 = vector.broadcast %68 : vector<2x1xi32> to vector<2x512xi32>
    %70 = arith.cmpi eq, %20, %69 : vector<2x512xi32>
    %71 = arith.extui %70 : vector<2x512xi1> to vector<2x512xi32>
    %72 = arith.sitofp %71 : vector<2x512xi32> to vector<2x512xf32>
    %73 = tpu.concatenate %33, %46, %59, %72 in 1 : vector<2x512xf32>, vector<2x512xf32>, vector<2x512xf32>, vector<2x512xf32> -> vector<2x2048xf32>
    %c0_28 = arith.constant 0 : index
    %c0_29 = arith.constant 0 : index
    %74 = vector.load %arg8[%c0_28, %c0_29] : memref<2048x32xf32, #tpu.memory_space<vmem>>, vector<2048x32xf32>
    %cst_30 = arith.constant dense<0.000000e+00> : vector<2x32xf32>
    %75 = tpu.matmul %73, %74, %cst_30 {dimension_numbers = #tpu.dot_dimension_numbers<[1], [0], [0], [1], [0, 0, 1, 1], [], []>} : vector<2x2048xf32>, vector<2048x32xf32>, vector<2x32xf32> -> vector<2x32xf32>
    %76 = arith.subf %75, %14 : vector<2x32xf32>
    %77 = arith.mulf %76, %76 : vector<2x32xf32>
    %cst_31 = arith.constant dense<0.000000e+00> : vector<2xf32>
    %78 = vector.multi_reduction <add>, %77, %cst_31 [1] : vector<2x32xf32> to vector<2xf32>
    %79 = vector.shape_cast %78 : vector<2xf32> to vector<2x1xf32>
    %c0_32 = arith.constant 0 : index
    %c0_33 = arith.constant 0 : index
    %80 = vector.load %arg14[%c0_32, %c0_33] : memref<2x1xf32, #tpu.memory_space<vmem>>, vector<2x1xf32>
    tpu.vector_store %arg14[%c0_32, %c0_33], %79 {strides = array<i32>} : memref<2x1xf32, #tpu.memory_space<vmem>>, vector<2x1xf32>,
    %c0_34 = arith.constant 0 : index
    %c0_35 = arith.constant 0 : index
    %81 = vector.load %arg9[%c0_34, %c0_35] : memref<32x512xf32, #tpu.memory_space<vmem>>, vector<32x512xf32>
    %cst_36 = arith.constant dense<0.000000e+00> : vector<2x512xf32>
    %82 = tpu.matmul %75, %81, %cst_36 {dimension_numbers = #tpu.dot_dimension_numbers<[1], [0], [0], [1], [0, 0, 1, 1], [], []>} : vector<2x32xf32>, vector<32x512xf32>, vector<2x512xf32> -> vector<2x512xf32>
    %c0_37 = arith.constant 0 : index
    %c0_38 = arith.constant 0 : index
    %83 = vector.load %arg10[%c0_37, %c0_38] : memref<1x512xf32, #tpu.memory_space<vmem>>, vector<1x512xf32>
    %84 = vector.broadcast %83 : vector<1x512xf32> to vector<2x512xf32>
    %85 = arith.addf %82, %84 : vector<2x512xf32>
    %cst_39 = arith.constant 0.000000e+00 : f32
    %86 = vector.broadcast %cst_39 : f32 to vector<2x512xf32>
    %87 = arith.maximumf %85, %86 : vector<2x512xf32>
    %c0_40 = arith.constant 0 : index
    %c0_41 = arith.constant 0 : index
    %88 = vector.load %arg11[%c0_40, %c0_41] : memref<512x128xf32, #tpu.memory_space<vmem>>, vector<512x128xf32>
    %cst_42 = arith.constant dense<0.000000e+00> : vector<2x128xf32>
    %89 = tpu.matmul %87, %88, %cst_42 {dimension_numbers = #tpu.dot_dimension_numbers<[1], [0], [0], [1], [0, 0, 1, 1], [], []>} : vector<2x512xf32>, vector<512x128xf32>, vector<2x128xf32> -> vector<2x128xf32>
    %c0_43 = arith.constant 0 : index
    %c0_44 = arith.constant 0 : index
    %90 = vector.load %arg12[%c0_43, %c0_44] : memref<1x128xf32, #tpu.memory_space<vmem>>, vector<1x128xf32>
    %91 = vector.broadcast %90 : vector<1x128xf32> to vector<2x128xf32>
    %92 = arith.addf %89, %91 : vector<2x128xf32>
    %c0_45 = arith.constant 0 : index
    %c0_46 = arith.constant 0 : index
    %93 = vector.load %arg13[%c0_45, %c0_46] : memref<2x128xf32, #tpu.memory_space<vmem>>, vector<2x128xf32>
    tpu.vector_store %arg13[%c0_45, %c0_46], %92 {strides = array<i32>} : memref<2x128xf32, #tpu.memory_space<vmem>>, vector<2x128xf32>,
    return
  }
  func.func @transform_0(%arg0: i32) -> (i32, i32) {
    %c0_i32 = arith.constant 0 : i32
    %c0_i32_0 = arith.constant 0 : i32
    return %arg0, %c0_i32 : i32, i32
  }
  func.func @transform_1(%arg0: i32) -> (i32, i32) {
    %c0_i32 = arith.constant 0 : i32
    %c0_i32_0 = arith.constant 0 : i32
    %c0_i32_1 = arith.constant 0 : i32
    return %c0_i32, %c0_i32_0 : i32, i32
  }
  func.func @transform_2(%arg0: i32) -> (i32, i32) {
    %c0_i32 = arith.constant 0 : i32
    %c0_i32_0 = arith.constant 0 : i32
    %c0_i32_1 = arith.constant 0 : i32
    return %c0_i32, %c0_i32_0 : i32, i32
  }
  func.func @transform_3(%arg0: i32) -> (i32, i32) {
    %c0_i32 = arith.constant 0 : i32
    %c0_i32_0 = arith.constant 0 : i32
    %c0_i32_1 = arith.constant 0 : i32
    return %c0_i32, %c0_i32_0 : i32, i32
  }
  func.func @transform_4(%arg0: i32) -> (i32, i32) {
    %c0_i32 = arith.constant 0 : i32
    %c0_i32_0 = arith.constant 0 : i32
    %c0_i32_1 = arith.constant 0 : i32
    return %c0_i32, %c0_i32_0 : i32, i32
  }
  func.func @transform_5(%arg0: i32) -> (i32, i32) {
    %c0_i32 = arith.constant 0 : i32
    %c0_i32_0 = arith.constant 0 : i32
    %c0_i32_1 = arith.constant 0 : i32
    return %c0_i32, %c0_i32_0 : i32, i32
  }
  func.func @transform_6(%arg0: i32) -> (i32, i32) {
    %c0_i32 = arith.constant 0 : i32
    %c0_i32_0 = arith.constant 0 : i32
    %c0_i32_1 = arith.constant 0 : i32
    return %c0_i32, %c0_i32_0 : i32, i32
  }
  func.func @transform_7(%arg0: i32) -> (i32, i32) {
    %c0_i32 = arith.constant 0 : i32
    %c0_i32_0 = arith.constant 0 : i32
    %c0_i32_1 = arith.constant 0 : i32
    return %c0_i32, %c0_i32_0 : i32, i32
  }
  func.func @transform_8(%arg0: i32) -> (i32, i32) {
    %c0_i32 = arith.constant 0 : i32
    %c0_i32_0 = arith.constant 0 : i32
    %c0_i32_1 = arith.constant 0 : i32
    return %c0_i32, %c0_i32_0 : i32, i32
  }
  func.func @transform_9(%arg0: i32) -> (i32, i32) {
    %c0_i32 = arith.constant 0 : i32
    %c0_i32_0 = arith.constant 0 : i32
    %c0_i32_1 = arith.constant 0 : i32
    return %c0_i32, %c0_i32_0 : i32, i32
  }
  func.func @transform_10(%arg0: i32) -> (i32, i32) {
    %c0_i32 = arith.constant 0 : i32
    %c0_i32_0 = arith.constant 0 : i32
    %c0_i32_1 = arith.constant 0 : i32
    return %c0_i32, %c0_i32_0 : i32, i32
  }
  func.func @transform_11(%arg0: i32) -> (i32, i32) {
    %c0_i32 = arith.constant 0 : i32
    %c0_i32_0 = arith.constant 0 : i32
    %c0_i32_1 = arith.constant 0 : i32
    return %c0_i32, %c0_i32_0 : i32, i32
  }
  func.func @transform_12(%arg0: i32) -> (i32, i32) {
    %c0_i32 = arith.constant 0 : i32
    %c0_i32_0 = arith.constant 0 : i32
    return %arg0, %c0_i32 : i32, i32
  }
  func.func @transform_13(%arg0: i32) -> (i32, i32) {
    %c0_i32 = arith.constant 0 : i32
    %c0_i32_0 = arith.constant 0 : i32
    return %arg0, %c0_i32 : i32, i32
  }
}

</mosaic_0001>

<llo_original>
// kernel: _lambda_.1
$region0: #{_lambda_.1}
  #allocation0 [shape = 'u32[]', space=smem, size = 0x4, offset = 0x4, fixed_abs, tag = 'smem constant byte address 0x4 - core index']
  #allocation1 [shape = 'u32[72,128]{1,0:T(1,128)}', space=vmem, size = 0x9000, scoped, tag = 'internal scratch']
  %s0 = inlined_call_operand.vmem [shape: f32[2,128], index: 0, kind: input, shape index: {}]
  %s1 = inlined_call_operand.hbm [shape: f32[128,512], index: 1, kind: input, shape index: {}]
  %s2 = inlined_call_operand.vmem [shape: f32[1,512], index: 2, kind: input, shape index: {}]
  %s3 = inlined_call_operand.hbm [shape: f32[512,32], index: 3, kind: input, shape index: {}]
  %s4 = inlined_call_operand.hbm [shape: f32[1,32], index: 4, kind: input, shape index: {}]
  %s5 = inlined_call_operand.hbm [shape: f32[32,2048], index: 5, kind: input, shape index: {}]
  %s6 = inlined_call_operand.vmem [shape: f32[1,2048], index: 6, kind: input, shape index: {}]
  %s7 = inlined_call_operand.hbm [shape: f32[2048,32], index: 7, kind: input, shape index: {}]
  %s8 = inlined_call_operand.hbm [shape: f32[32,512], index: 8, kind: input, shape index: {}]
  %s9 = inlined_call_operand.vmem [shape: f32[1,512], index: 9, kind: input, shape index: {}]
  %s10 = inlined_call_operand.hbm [shape: f32[512,128], index: 10, kind: input, shape index: {}]
  %s11 = inlined_call_operand.vmem [shape: f32[1,128], index: 11, kind: input, shape index: {}]
  %s12 = inlined_call_operand.vmem [shape: f32[2,128], index: 12, kind: output, shape index: {0}]
  %s13 = inlined_call_operand.vmem [shape: f32[2,1], index: 13, kind: output, shape index: {1}]
  %14 = xla_tuple %s12, %s13
  %s15 = sld [smem:[#allocation0]]
  $region94: #{_lambda_.1} parent=0
    _
  %s17 = ssub.s32 1, %s15
  %s18 = scalar_select 0, %s17, %s15
  $region1: #{_lambda_.1} parent=0
    #allocation2 [shape = 'u8[262144]{0}', space=vmem, size = 0x40000, scoped, tag = 'input window, operand 1, single buffered']
    #allocation3 [shape = 's32[1]{0}', space=sflag, size = 0x4, scoped, tag = 'scoped memory for _lambda_.1']
    #allocation4 [shape = 'u8[262144]{0}', space=vmem, size = 0x40000, scoped, tag = 'input window, operand 3, single buffered']
    #allocation5 [shape = 's32[1]{0}', space=sflag, size = 0x4, scoped, tag = 'scoped memory for _lambda_.1']
    #allocation6 [shape = 'u8[512]{0}', space=vmem, size = 0x400, scoped, tag = 'input window, operand 4, single buffered']
    #allocation7 [shape = 'u8[262144]{0}', space=vmem, size = 0x40000, scoped, tag = 'input window, operand 5, single buffered']
    #allocation8 [shape = 's32[1]{0}', space=sflag, size = 0x4, scoped, tag = 'scoped memory for _lambda_.1']
    #allocation9 [shape = 'u8[1048576]{0}', space=vmem, size = 0x100000, scoped, tag = 'input window, operand 7, single buffered']
    #allocation10 [shape = 'u8[65536]{0}', space=vmem, size = 0x10000, scoped, tag = 'input window, operand 8, single buffered']
    #allocation11 [shape = 's32[1]{0}', space=sflag, size = 0x4, scoped, tag = 'scoped memory for _lambda_.1']
    #allocation12 [shape = 'u8[262144]{0}', space=vmem, size = 0x40000, scoped, tag = 'input window, operand 10, single buffered']
    %19 = vsyncpa [#allocation3], 0
    %20 = vsyncpa [#allocation5], 0
    %21 = vsyncpa [#allocation8], 0
    %22 = vsyncpa [#allocation11], 0
    // Predicated region
    $region2: #{_lambda_.1} parent=1 // pred_check
      _
    $region3: #{_lambda_.1} parent=1 // pred_check_branch
      %24 = sbr.rel (0) target = $region5
    $region4: #{_lambda_.1} parent=1 // pred_region
      _
    $region5: #{_lambda_.1} parent=1 // pred_fallthru
      _
    // Predicated region
    $region6: #{_lambda_.1} parent=1 // pred_check
      _
    $region7: #{_lambda_.1} parent=1 // pred_check_branch
      %26 = sbr.rel (0) target = $region9
    $region8: #{_lambda_.1} parent=1 // pred_region
      %28 = vsyncadd [#allocation3], 0
      %s29 = sshll.u32 %s1, 4
      %s30 = int_to_ptr.hbm [resolvable:$true] %s29
      %s31 = sshll.u32 [#allocation2], 4
      %s32 = int_to_ptr.vmem [resolvable:$true] %s31
      %37 = dma.hbm_to_vmem [thread:$0]  %s30, 8192, %s32, [#allocation3], 512, 512, 32
    $region9: #{_lambda_.1} parent=1 // pred_fallthru
      _
    // Predicated region
    $region10: #{_lambda_.1} parent=1 // pred_check
      _
    $region11: #{_lambda_.1} parent=1 // pred_check_branch
      %39 = sbr.rel (0) target = $region13
    $region12: #{_lambda_.1} parent=1 // pred_region
      _
    $region13: #{_lambda_.1} parent=1 // pred_fallthru
      _
    // Predicated region
    $region14: #{_lambda_.1} parent=1 // pred_check
      _
    $region15: #{_lambda_.1} parent=1 // pred_check_branch
      %41 = sbr.rel (0) target = $region17
    $region16: #{_lambda_.1} parent=1 // pred_region
      %43 = vsyncadd [#allocation5], 0
      %s44 = sshll.u32 %s3, 4
      %s45 = int_to_ptr.hbm [resolvable:$true] %s44
      %s46 = sshll.u32 [#allocation4], 4
      %s47 = int_to_ptr.vmem [resolvable:$true] %s46
      %52 = dma.hbm_to_vmem [thread:$0]  %s45, 8192, %s47, [#allocation5], 128, 128, 8
    $region17: #{_lambda_.1} parent=1 // pred_fallthru
      _
    // Predicated region
    $region18: #{_lambda_.1} parent=1 // pred_check
      _
    $region19: #{_lambda_.1} parent=1 // pred_check_branch
      %54 = sbr.rel (0) target = $region21
    $region20: #{_lambda_.1} parent=1 // pred_region
      %56 = vsyncadd [#allocation5], 0
      %s58 = sshll.u32 %s4, 4
      %s59 = int_to_ptr.hbm [resolvable:$true] %s58
      %s60 = sshll.u32 [#allocation6], 4
      %s61 = int_to_ptr.vmem [resolvable:$true] %s60
      %63 = dma.hbm_to_vmem [thread:$0]  %s59, 16, %s61, [#allocation5]
    $region21: #{_lambda_.1} parent=1 // pred_fallthru
      _
    // Predicated region
    $region22: #{_lambda_.1} parent=1 // pred_check
      _
    $region23: #{_lambda_.1} parent=1 // pred_check_branch
      %65 = sbr.rel (0) target = $region25
    $region24: #{_lambda_.1} parent=1 // pred_region
      %67 = vsyncadd [#allocation8], 0
      %s68 = sshll.u32 %s5, 4
      %s69 = int_to_ptr.hbm [resolvable:$true] %s68
      %s70 = sshll.u32 [#allocation7], 4
      %s71 = int_to_ptr.vmem [resolvable:$true] %s70
      %76 = dma.hbm_to_vmem [thread:$0]  %s69, 8192, %s71, [#allocation8], 2048, 2048, 128
    $region25: #{_lambda_.1} parent=1 // pred_fallthru
      _
    // Predicated region
    $region26: #{_lambda_.1} parent=1 // pred_check
      _
    $region27: #{_lambda_.1} parent=1 // pred_check_branch
      %78 = sbr.rel (0) target = $region29
    $region28: #{_lambda_.1} parent=1 // pred_region
      _
    $region29: #{_lambda_.1} parent=1 // pred_fallthru
      _
    // Predicated region
    $region30: #{_lambda_.1} parent=1 // pred_check
      _
    $region31: #{_lambda_.1} parent=1 // pred_check_branch
      %80 = sbr.rel (0) target = $region33
    $region32: #{_lambda_.1} parent=1 // pred_region
      %82 = vsyncadd [#allocation8], 0
      %s83 = sshll.u32 %s7, 4
      %s84 = int_to_ptr.hbm [resolvable:$true] %s83
      %s85 = sshll.u32 [#allocation9], 4
      %s86 = int_to_ptr.vmem [resolvable:$true] %s85
      %91 = dma.hbm_to_vmem [thread:$0]  %s84, 32768, %s86, [#allocation8], 128, 128, 8
    $region33: #{_lambda_.1} parent=1 // pred_fallthru
      _
    // Predicated region
    $region34: #{_lambda_.1} parent=1 // pred_check
      _
    $region35: #{_lambda_.1} parent=1 // pred_check_branch
      %93 = sbr.rel (0) target = $region37
    $region36: #{_lambda_.1} parent=1 // pred_region
      %95 = vsyncadd [#allocation11], 0
      %s96 = sshll.u32 %s8, 4
      %s97 = int_to_ptr.hbm [resolvable:$true] %s96
      %s98 = sshll.u32 [#allocation10], 4
      %s99 = int_to_ptr.vmem [resolvable:$true] %s98
      %104 = dma.hbm_to_vmem [thread:$0]  %s97, 2048, %s99, [#allocation11], 512, 512, 32
    $region37: #{_lambda_.1} parent=1 // pred_fallthru
      _
    // Predicated region
    $region38: #{_lambda_.1} parent=1 // pred_check
      _
    $region39: #{_lambda_.1} parent=1 // pred_check_branch
      %106 = sbr.rel (0) target = $region41
    $region40: #{_lambda_.1} parent=1 // pred_region
      _
    $region41: #{_lambda_.1} parent=1 // pred_fallthru
      _
    // Predicated region
    $region42: #{_lambda_.1} parent=1 // pred_check
      _
    $region43: #{_lambda_.1} parent=1 // pred_check_branch
      %108 = sbr.rel (0) target = $region45
    $region44: #{_lambda_.1} parent=1 // pred_region
      %110 = vsyncadd [#allocation11], 0
      %s111 = sshll.u32 %s10, 4
      %s112 = int_to_ptr.hbm [resolvable:$true] %s111
      %s113 = sshll.u32 [#allocation12], 4
      %s114 = int_to_ptr.vmem [resolvable:$true] %s113
      %119 = dma.hbm_to_vmem [thread:$0]  %s112, 8192, %s114, [#allocation11], 128, 128, 8
    $region45: #{_lambda_.1} parent=1 // pred_fallthru
      _
    // Predicated region
    $region46: #{_lambda_.1} parent=1 // pred_check
      _
    $region47: #{_lambda_.1} parent=1 // pred_check_branch
      %121 = sbr.rel (0) target = $region49
    $region48: #{_lambda_.1} parent=1 // pred_region
      _
    $region49: #{_lambda_.1} parent=1 // pred_fallthru
      _
    // Predicated region
    $region50: #{_lambda_.1} parent=1 // pred_check
      _
    $region51: #{_lambda_.1} parent=1 // pred_check_branch
      %123 = sbr.rel (0) target = $region53
    $region52: #{_lambda_.1} parent=1 // pred_region
      %125 = dma.done [#allocation3], 8192
    $region53: #{_lambda_.1} parent=1 // pred_fallthru
      _
    // Predicated region
    $region54: #{_lambda_.1} parent=1 // pred_check
      _
    $region55: #{_lambda_.1} parent=1 // pred_check_branch
      %127 = sbr.rel (0) target = $region57
    $region56: #{_lambda_.1} parent=1 // pred_region
      %129 = dma.done [#allocation5], 8192
    $region57: #{_lambda_.1} parent=1 // pred_fallthru
      _
    // Predicated region
    $region58: #{_lambda_.1} parent=1 // pred_check
      _
    $region59: #{_lambda_.1} parent=1 // pred_check_branch
      %131 = sbr.rel (0) target = $region61
    $region60: #{_lambda_.1} parent=1 // pred_region
      %133 = dma.done [#allocation5], 16
    $region61: #{_lambda_.1} parent=1 // pred_fallthru
      _
    // Predicated region
    $region62: #{_lambda_.1} parent=1 // pred_check
      _
    $region63: #{_lambda_.1} parent=1 // pred_check_branch
      %135 = sbr.rel (0) target = $region65
    $region64: #{_lambda_.1} parent=1 // pred_region
      %137 = dma.done [#allocation8], 8192
    $region65: #{_lambda_.1} parent=1 // pred_fallthru
      _
    // Predicated region
    $region66: #{_lambda_.1} parent=1 // pred_check
      _
    $region67: #{_lambda_.1} parent=1 // pred_check_branch
      %139 = sbr.rel (0) target = $region69
    $region68: #{_lambda_.1} parent=1 // pred_region
      %141 = dma.done [#allocation8], 32768
    $region69: #{_lambda_.1} parent=1 // pred_fallthru
      _
    // Predicated region
    $region70: #{_lambda_.1} parent=1 // pred_check
      _
    $region71: #{_lambda_.1} parent=1 // pred_check_branch
      %143 = sbr.rel (0) target = $region73
    $region72: #{_lambda_.1} parent=1 // pred_region
      %145 = dma.done [#allocation11], 2048
    $region73: #{_lambda_.1} parent=1 // pred_fallthru
      _
    // Predicated region
    $region74: #{_lambda_.1} parent=1 // pred_check
      _
    $region75: #{_lambda_.1} parent=1 // pred_check_branch
      %147 = sbr.rel (0) target = $region77
    $region76: #{_lambda_.1} parent=1 // pred_region
      %149 = dma.done [#allocation11], 8192
    $region77: #{_lambda_.1} parent=1 // pred_fallthru
      _
    %v150 = vld [vmem:[%s0] sm:$0x3]
    %v151 = vld [vmem:[#allocation2] sm:$0xff]
    %v152 = vld [vmem:[#allocation2 + $0x8] sm:$0xff]
    %v153 = vld [vmem:[#allocation2 + $0x10] sm:$0xff]
    %v154 = vld [vmem:[#allocation2 + $0x18] sm:$0xff]
    %v155 = vld [vmem:[#allocation2 + $0x20] sm:$0xff]
    %v156 = vld [vmem:[#allocation2 + $0x28] sm:$0xff]
    %v157 = vld [vmem:[#allocation2 + $0x30] sm:$0xff]
    %v158 = vld [vmem:[#allocation2 + $0x38] sm:$0xff]
    %v159 = vld [vmem:[#allocation2 + $0x40] sm:$0xff]
    %v160 = vld [vmem:[#allocation2 + $0x48] sm:$0xff]
    %v161 = vld [vmem:[#allocation2 + $0x50] sm:$0xff]
    %v162 = vld [vmem:[#allocation2 + $0x58] sm:$0xff]
    %v163 = vld [vmem:[#allocation2 + $0x60] sm:$0xff]
    %v164 = vld [vmem:[#allocation2 + $0x68] sm:$0xff]
    %v165 = vld [vmem:[#allocation2 + $0x70] sm:$0xff]
    %v166 = vld [vmem:[#allocation2 + $0x78] sm:$0xff]
    %v167 = vld [vmem:[#allocation2 + $0x80] sm:$0xff]
    %v168 = vld [vmem:[#allocation2 + $0x88] sm:$0xff]
    %v169 = vld [vmem:[#allocation2 + $0x90] sm:$0xff]
    %v170 = vld [vmem:[#allocation2 + $0x98] sm:$0xff]
    %v171 = vld [vmem:[#allocation2 + $0xa0] sm:$0xff]
    %v172 = vld [vmem:[#allocation2 + $0xa8] sm:$0xff]
    %v173 = vld [vmem:[#allocation2 + $0xb0] sm:$0xff]
    %v174 = vld [vmem:[#allocation2 + $0xb8] sm:$0xff]
    %v175 = vld [vmem:[#allocation2 + $0xc0] sm:$0xff]
    %v176 = vld [vmem:[#allocation2 + $0xc8] sm:$0xff]
    %v177 = vld [vmem:[#allocation2 + $0xd0] sm:$0xff]
    %v178 = vld [vmem:[#allocation2 + $0xd8] sm:$0xff]
    %v179 = vld [vmem:[#allocation2 + $0xe0] sm:$0xff]
    %v180 = vld [vmem:[#allocation2 + $0xe8] sm:$0xff]
    %v181 = vld [vmem:[#allocation2 + $0xf0] sm:$0xff]
    %v182 = vld [vmem:[#allocation2 + $0xf8] sm:$0xff]
    %v183 = vld [vmem:[#allocation2 + $0x100] sm:$0xff]
    %v184 = vld [vmem:[#allocation2 + $0x108] sm:$0xff]
    %v185 = vld [vmem:[#allocation2 + $0x110] sm:$0xff]
    %v186 = vld [vmem:[#allocation2 + $0x118] sm:$0xff]
    %v187 = vld [vmem:[#allocation2 + $0x120] sm:$0xff]
    %v188 = vld [vmem:[#allocation2 + $0x128] sm:$0xff]
    %v189 = vld [vmem:[#allocation2 + $0x130] sm:$0xff]
    %v190 = vld [vmem:[#allocation2 + $0x138] sm:$0xff]
    %v191 = vld [vmem:[#allocation2 + $0x140] sm:$0xff]
    %v192 = vld [vmem:[#allocation2 + $0x148] sm:$0xff]
    %v193 = vld [vmem:[#allocation2 + $0x150] sm:$0xff]
    %v194 = vld [vmem:[#allocation2 + $0x158] sm:$0xff]
    %v195 = vld [vmem:[#allocation2 + $0x160] sm:$0xff]
    %v196 = vld [vmem:[#allocation2 + $0x168] sm:$0xff]
    %v197 = vld [vmem:[#allocation2 + $0x170] sm:$0xff]
    %v198 = vld [vmem:[#allocation2 + $0x178] sm:$0xff]
    %v199 = vld [vmem:[#allocation2 + $0x180] sm:$0xff]
    %v200 = vld [vmem:[#allocation2 + $0x188] sm:$0xff]
    %v201 = vld [vmem:[#allocation2 + $0x190] sm:$0xff]
    %v202 = vld [vmem:[#allocation2 + $0x198] sm:$0xff]
    %v203 = vld [vmem:[#allocation2 + $0x1a0] sm:$0xff]
    %v204 = vld [vmem:[#allocation2 + $0x1a8] sm:$0xff]
    %v205 = vld [vmem:[#allocation2 + $0x1b0] sm:$0xff]
    %v206 = vld [vmem:[#allocation2 + $0x1b8] sm:$0xff]
    %v207 = vld [vmem:[#allocation2 + $0x1c0] sm:$0xff]
    %v208 = vld [vmem:[#allocation2 + $0x1c8] sm:$0xff]
    %v209 = vld [vmem:[#allocation2 + $0x1d0] sm:$0xff]
    %v210 = vld [vmem:[#allocation2 + $0x1d8] sm:$0xff]
    %v211 = vld [vmem:[#allocation2 + $0x1e0] sm:$0xff]
    %v212 = vld [vmem:[#allocation2 + $0x1e8] sm:$0xff]
    %v213 = vld [vmem:[#allocation2 + $0x1f0] sm:$0xff]
    %v214 = vld [vmem:[#allocation2 + $0x1f8] sm:$0xff]
    %v215 = vld [vmem:[%s2] sm:$0xf]
    %v217 = vperm.slane %v215, 0
    %v218 = vperm.slane %v215, 1
    %v219 = vperm.slane %v215, 2
    %v220 = vperm.slane %v215, 3
    %225 = vmatpush.msra.mxu0 %v211
    %226 = vmatpush.msra.mxu0 %v207
    %227 = vmatpush.msra.mxu0 %v203
    %228 = vmatpush.msra.mxu0 %v199
    %229 = vmatpush.msra.mxu0 %v195
    %230 = vmatpush.msra.mxu0 %v191
    %231 = vmatpush.msra.mxu0 %v187
    %232 = vmatpush.msra.mxu0 %v183
    %233 = vmatpush.msra.mxu0 %v179
    %234 = vmatpush.msra.mxu0 %v175
    %235 = vmatpush.msra.mxu0 %v171
    %236 = vmatpush.msra.mxu0 %v167
    %237 = vmatpush.msra.mxu0 %v163
    %238 = vmatpush.msra.mxu0 %v159
    %239 = vmatpush.msra.mxu0 %v155
    %240 = vmatpush.msra.mxu0 %v151
    %241 = vmatmul.f32.gmra.mxu0 %v150
    %v242 = vpop.f32.mrf.mxu0
    %v243 = vadd.f32 %v217, %v242
    %244 = vdwg.mxu0
    %245 = vmatpush.msra.mxu0 %v212
    %246 = vmatpush.msra.mxu0 %v208
    %247 = vmatpush.msra.mxu0 %v204
    %248 = vmatpush.msra.mxu0 %v200
    %249 = vmatpush.msra.mxu0 %v196
    %250 = vmatpush.msra.mxu0 %v192
    %251 = vmatpush.msra.mxu0 %v188
    %252 = vmatpush.msra.mxu0 %v184
    %253 = vmatpush.msra.mxu0 %v180
    %254 = vmatpush.msra.mxu0 %v176
    %255 = vmatpush.msra.mxu0 %v172
    %256 = vmatpush.msra.mxu0 %v168
    %257 = vmatpush.msra.mxu0 %v164
    %258 = vmatpush.msra.mxu0 %v160
    %259 = vmatpush.msra.mxu0 %v156
    %260 = vmatpush.msra.mxu0 %v152
    %261 = vmatmul.f32.gmra.mxu0 %v150
    %v262 = vpop.f32.mrf.mxu0
    %v263 = vadd.f32 %v218, %v262
    %264 = vdwg.mxu0
    %265 = vmatpush.msra.mxu0 %v213
    %266 = vmatpush.msra.mxu0 %v209
    %267 = vmatpush.msra.mxu0 %v205
    %268 = vmatpush.msra.mxu0 %v201
    %269 = vmatpush.msra.mxu0 %v197
    %270 = vmatpush.msra.mxu0 %v193
    %271 = vmatpush.msra.mxu0 %v189
    %272 = vmatpush.msra.mxu0 %v185
    %273 = vmatpush.msra.mxu0 %v181
    %274 = vmatpush.msra.mxu0 %v177
    %275 = vmatpush.msra.mxu0 %v173
    %276 = vmatpush.msra.mxu0 %v169
    %277 = vmatpush.msra.mxu0 %v165
    %278 = vmatpush.msra.mxu0 %v161
    %279 = vmatpush.msra.mxu0 %v157
    %280 = vmatpush.msra.mxu0 %v153
    %281 = vmatmul.f32.gmra.mxu0 %v150
    %v282 = vpop.f32.mrf.mxu0
    %v283 = vadd.f32 %v219, %v282
    %284 = vdwg.mxu0
    %285 = vmatpush.msra.mxu0 %v214
    %286 = vmatpush.msra.mxu0 %v210
    %287 = vmatpush.msra.mxu0 %v206
    %288 = vmatpush.msra.mxu0 %v202
    %289 = vmatpush.msra.mxu0 %v198
    %290 = vmatpush.msra.mxu0 %v194
    %291 = vmatpush.msra.mxu0 %v190
    %292 = vmatpush.msra.mxu0 %v186
    %293 = vmatpush.msra.mxu0 %v182
    %294 = vmatpush.msra.mxu0 %v178
    %295 = vmatpush.msra.mxu0 %v174
    %296 = vmatpush.msra.mxu0 %v170
    %297 = vmatpush.msra.mxu0 %v166
    %298 = vmatpush.msra.mxu0 %v162
    %299 = vmatpush.msra.mxu0 %v158
    %300 = vmatpush.msra.mxu0 %v154
    %301 = vmatmul.f32.gmra.mxu0 %v150
    %v302 = vpop.f32.mrf.mxu0
    %v303 = vadd.f32 %v220, %v302
    %304 = vdwg.mxu0
    %v305 = vmax.f32 %v243, 0.0
    %v306 = vmax.f32 %v263, 0.0
    %v307 = vmax.f32 %v283, 0.0
    %v308 = vmax.f32 %v303, 0.0
    %v309 = vld [vmem:[#allocation4] sm:$0xff]
    %v310 = vld [vmem:[#allocation4 + $0x8] sm:$0xff]
    %v311 = vld [vmem:[#allocation4 + $0x10] sm:$0xff]
    %v312 = vld [vmem:[#allocation4 + $0x18] sm:$0xff]
    %v313 = vld [vmem:[#allocation4 + $0x20] sm:$0xff]
    %v314 = vld [vmem:[#allocation4 + $0x28] sm:$0xff]
    %v315 = vld [vmem:[#allocation4 + $0x30] sm:$0xff]
    %v316 = vld [vmem:[#allocation4 + $0x38] sm:$0xff]
    %v317 = vld [vmem:[#allocation4 + $0x40] sm:$0xff]
    %v318 = vld [vmem:[#allocation4 + $0x48] sm:$0xff]
    %v319 = vld [vmem:[#allocation4 + $0x50] sm:$0xff]
    %v320 = vld [vmem:[#allocation4 + $0x58] sm:$0xff]
    %v321 = vld [vmem:[#allocation4 + $0x60] sm:$0xff]
    %v322 = vld [vmem:[#allocation4 + $0x68] sm:$0xff]
    %v323 = vld [vmem:[#allocation4 + $0x70] sm:$0xff]
    %v324 = vld [vmem:[#allocation4 + $0x78] sm:$0xff]
    %v325 = vld [vmem:[#allocation4 + $0x80] sm:$0xff]
    %v326 = vld [vmem:[#allocation4 + $0x88] sm:$0xff]
    %v327 = vld [vmem:[#allocation4 + $0x90] sm:$0xff]
    %v328 = vld [vmem:[#allocation4 + $0x98] sm:$0xff]
    %v329 = vld [vmem:[#allocation4 + $0xa0] sm:$0xff]
    %v330 = vld [vmem:[#allocation4 + $0xa8] sm:$0xff]
    %v331 = vld [vmem:[#allocation4 + $0xb0] sm:$0xff]
    %v332 = vld [vmem:[#allocation4 + $0xb8] sm:$0xff]
    %v333 = vld [vmem:[#allocation4 + $0xc0] sm:$0xff]
    %v334 = vld [vmem:[#allocation4 + $0xc8] sm:$0xff]
    %v335 = vld [vmem:[#allocation4 + $0xd0] sm:$0xff]
    %v336 = vld [vmem:[#allocation4 + $0xd8] sm:$0xff]
    %v337 = vld [vmem:[#allocation4 + $0xe0] sm:$0xff]
    %v338 = vld [vmem:[#allocation4 + $0xe8] sm:$0xff]
    %v339 = vld [vmem:[#allocation4 + $0xf0] sm:$0xff]
    %v340 = vld [vmem:[#allocation4 + $0xf8] sm:$0xff]
    %v341 = vld [vmem:[#allocation4 + $0x100] sm:$0xff]
    %v342 = vld [vmem:[#allocation4 + $0x108] sm:$0xff]
    %v343 = vld [vmem:[#allocation4 + $0x110] sm:$0xff]
    %v344 = vld [vmem:[#allocation4 + $0x118] sm:$0xff]
    %v345 = vld [vmem:[#allocation4 + $0x120] sm:$0xff]
    %v346 = vld [vmem:[#allocation4 + $0x128] sm:$0xff]
    %v347 = vld [vmem:[#allocation4 + $0x130] sm:$0xff]
    %v348 = vld [vmem:[#allocation4 + $0x138] sm:$0xff]
    %v349 = vld [vmem:[#allocation4 + $0x140] sm:$0xff]
    %v350 = vld [vmem:[#allocation4 + $0x148] sm:$0xff]
    %v351 = vld [vmem:[#allocation4 + $0x150] sm:$0xff]
    %v352 = vld [vmem:[#allocation4 + $0x158] sm:$0xff]
    %v353 = vld [vmem:[#allocation4 + $0x160] sm:$0xff]
    %v354 = vld [vmem:[#allocation4 + $0x168] sm:$0xff]
    %v355 = vld [vmem:[#allocation4 + $0x170] sm:$0xff]
    %v356 = vld [vmem:[#allocation4 + $0x178] sm:$0xff]
    %v357 = vld [vmem:[#allocation4 + $0x180] sm:$0xff]
    %v358 = vld [vmem:[#allocation4 + $0x188] sm:$0xff]
    %v359 = vld [vmem:[#allocation4 + $0x190] sm:$0xff]
    %v360 = vld [vmem:[#allocation4 + $0x198] sm:$0xff]
    %v361 = vld [vmem:[#allocation4 + $0x1a0] sm:$0xff]
    %v362 = vld [vmem:[#allocation4 + $0x1a8] sm:$0xff]
    %v363 = vld [vmem:[#allocation4 + $0x1b0] sm:$0xff]
    %v364 = vld [vmem:[#allocation4 + $0x1b8] sm:$0xff]
    %v365 = vld [vmem:[#allocation4 + $0x1c0] sm:$0xff]
    %v366 = vld [vmem:[#allocation4 + $0x1c8] sm:$0xff]
    %v367 = vld [vmem:[#allocation4 + $0x1d0] sm:$0xff]
    %v368 = vld [vmem:[#allocation4 + $0x1d8] sm:$0xff]
    %v369 = vld [vmem:[#allocation4 + $0x1e0] sm:$0xff]
    %v370 = vld [vmem:[#allocation4 + $0x1e8] sm:$0xff]
    %v371 = vld [vmem:[#allocation4 + $0x1f0] sm:$0xff]
    %v372 = vld [vmem:[#allocation4 + $0x1f8] sm:$0xff]
    %v373 = vld [vmem:[#allocation6] sm:$0x1]
    %v375 = vperm.slane %v373, 0
    %377 = vmatpush.msra.mxu0 %v324
    %378 = vmatpush.msra.mxu0 %v323
    %379 = vmatpush.msra.mxu0 %v322
    %380 = vmatpush.msra.mxu0 %v321
    %381 = vmatpush.msra.mxu0 %v320
    %382 = vmatpush.msra.mxu0 %v319
    %383 = vmatpush.msra.mxu0 %v318
    %384 = vmatpush.msra.mxu0 %v317
    %385 = vmatpush.msra.mxu0 %v316
    %386 = vmatpush.msra.mxu0 %v315
    %387 = vmatpush.msra.mxu0 %v314
    %388 = vmatpush.msra.mxu0 %v313
    %389 = vmatpush.msra.mxu0 %v312
    %390 = vmatpush.msra.mxu0 %v311
    %391 = vmatpush.msra.mxu0 %v310
    %392 = vmatpush.msra.mxu0 %v309
    %393 = vmatmul.f32.gmra.mxu0 %v305
    %v394 = vpop.f32.mrf.mxu0
    %v395 = vadd.f32 %v375, %v394
    %396 = vdwg.mxu0
    %397 = vmatpush.msra.mxu0 %v340
    %398 = vmatpush.msra.mxu0 %v339
    %399 = vmatpush.msra.mxu0 %v338
    %400 = vmatpush.msra.mxu0 %v337
    %401 = vmatpush.msra.mxu0 %v336
    %402 = vmatpush.msra.mxu0 %v335
    %403 = vmatpush.msra.mxu0 %v334
    %404 = vmatpush.msra.mxu0 %v333
    %405 = vmatpush.msra.mxu0 %v332
    %406 = vmatpush.msra.mxu0 %v331
    %407 = vmatpush.msra.mxu0 %v330
    %408 = vmatpush.msra.mxu0 %v329
    %409 = vmatpush.msra.mxu0 %v328
    %410 = vmatpush.msra.mxu0 %v327
    %411 = vmatpush.msra.mxu0 %v326
    %412 = vmatpush.msra.mxu0 %v325
    %413 = vmatmul.f32.gmra.mxu0 %v306
    %v414 = vpop.f32.mrf.mxu0
    %v415 = vadd.f32 %v395, %v414
    %416 = vdwg.mxu0
    %417 = vmatpush.msra.mxu0 %v356
    %418 = vmatpush.msra.mxu0 %v355
    %419 = vmatpush.msra.mxu0 %v354
    %420 = vmatpush.msra.mxu0 %v353
    %421 = vmatpush.msra.mxu0 %v352
    %422 = vmatpush.msra.mxu0 %v351
    %423 = vmatpush.msra.mxu0 %v350
    %424 = vmatpush.msra.mxu0 %v349
    %425 = vmatpush.msra.mxu0 %v348
    %426 = vmatpush.msra.mxu0 %v347
    %427 = vmatpush.msra.mxu0 %v346
    %428 = vmatpush.msra.mxu0 %v345
    %429 = vmatpush.msra.mxu0 %v344
    %430 = vmatpush.msra.mxu0 %v343
    %431 = vmatpush.msra.mxu0 %v342
    %432 = vmatpush.msra.mxu0 %v341
    %433 = vmatmul.f32.gmra.mxu0 %v307
    %v434 = vpop.f32.mrf.mxu0
    %v435 = vadd.f32 %v415, %v434
    %436 = vdwg.mxu0
    %437 = vmatpush.msra.mxu0 %v372
    %438 = vmatpush.msra.mxu0 %v371
    %439 = vmatpush.msra.mxu0 %v370
    %440 = vmatpush.msra.mxu0 %v369
    %441 = vmatpush.msra.mxu0 %v368
    %442 = vmatpush.msra.mxu0 %v367
    %443 = vmatpush.msra.mxu0 %v366
    %444 = vmatpush.msra.mxu0 %v365
    %445 = vmatpush.msra.mxu0 %v364
    %446 = vmatpush.msra.mxu0 %v363
    %447 = vmatpush.msra.mxu0 %v362
    %448 = vmatpush.msra.mxu0 %v361
    %449 = vmatpush.msra.mxu0 %v360
    %450 = vmatpush.msra.mxu0 %v359
    %451 = vmatpush.msra.mxu0 %v358
    %452 = vmatpush.msra.mxu0 %v357
    %453 = vmatmul.f32.gmra.mxu0 %v308
    %v454 = vpop.f32.mrf.mxu0
    %v455 = vadd.f32 %v435, %v454
    %456 = vdwg.mxu0
    %v457 = vmax.f32 %v455, 0.0
    %v458 = vld [vmem:[#allocation7] sm:$0xff]
    %v459 = vld [vmem:[#allocation7 + $0x8] sm:$0xff]
    %v460 = vld [vmem:[#allocation7 + $0x10] sm:$0xff]
    %v461 = vld [vmem:[#allocation7 + $0x18] sm:$0xff]
    %v462 = vld [vmem:[#allocation7 + $0x20] sm:$0xff]
    %v463 = vld [vmem:[#allocation7 + $0x28] sm:$0xff]
    %v464 = vld [vmem:[#allocation7 + $0x30] sm:$0xff]
    %v465 = vld [vmem:[#allocation7 + $0x38] sm:$0xff]
    %v466 = vld [vmem:[#allocation7 + $0x40] sm:$0xff]
    %v467 = vld [vmem:[#allocation7 + $0x48] sm:$0xff]
    %v468 = vld [vmem:[#allocation7 + $0x50] sm:$0xff]
    %v469 = vld [vmem:[#allocation7 + $0x58] sm:$0xff]
    %v470 = vld [vmem:[#allocation7 + $0x60] sm:$0xff]
    %v471 = vld [vmem:[#allocation7 + $0x68] sm:$0xff]
    %v472 = vld [vmem:[#allocation7 + $0x70] sm:$0xff]
    %v473 = vld [vmem:[#allocation7 + $0x78] sm:$0xff]
    %v474 = vld [vmem:[#allocation7 + $0x80] sm:$0xff]
    %v475 = vld [vmem:[#allocation7 + $0x88] sm:$0xff]
    %v476 = vld [vmem:[#allocation7 + $0x90] sm:$0xff]
    %v477 = vld [vmem:[#allocation7 + $0x98] sm:$0xff]
    %v478 = vld [vmem:[#allocation7 + $0xa0] sm:$0xff]
    %v479 = vld [vmem:[#allocation7 + $0xa8] sm:$0xff]
    %v480 = vld [vmem:[#allocation7 + $0xb0] sm:$0xff]
    %v481 = vld [vmem:[#allocation7 + $0xb8] sm:$0xff]
    %v482 = vld [vmem:[#allocation7 + $0xc0] sm:$0xff]
    %v483 = vld [vmem:[#allocation7 + $0xc8] sm:$0xff]
    %v484 = vld [vmem:[#allocation7 + $0xd0] sm:$0xff]
    %v485 = vld [vmem:[#allocation7 + $0xd8] sm:$0xff]
    %v486 = vld [vmem:[#allocation7 + $0xe0] sm:$0xff]
    %v487 = vld [vmem:[#allocation7 + $0xe8] sm:$0xff]
    %v488 = vld [vmem:[#allocation7 + $0xf0] sm:$0xff]
    %v489 = vld [vmem:[#allocation7 + $0xf8] sm:$0xff]
    %v490 = vld [vmem:[#allocation7 + $0x100] sm:$0xff]
    %v491 = vld [vmem:[#allocation7 + $0x108] sm:$0xff]
    %v492 = vld [vmem:[#allocation7 + $0x110] sm:$0xff]
    %v493 = vld [vmem:[#allocation7 + $0x118] sm:$0xff]
    %v494 = vld [vmem:[#allocation7 + $0x120] sm:$0xff]
    %v495 = vld [vmem:[#allocation7 + $0x128] sm:$0xff]
    %v496 = vld [vmem:[#allocation7 + $0x130] sm:$0xff]
    %v497 = vld [vmem:[#allocation7 + $0x138] sm:$0xff]
    %v498 = vld [vmem:[#allocation7 + $0x140] sm:$0xff]
    %v499 = vld [vmem:[#allocation7 + $0x148] sm:$0xff]
    %v500 = vld [vmem:[#allocation7 + $0x150] sm:$0xff]
    %v501 = vld [vmem:[#allocation7 + $0x158] sm:$0xff]
    %v502 = vld [vmem:[#allocation7 + $0x160] sm:$0xff]
    %v503 = vld [vmem:[#allocation7 + $0x168] sm:$0xff]
    %v504 = vld [vmem:[#allocation7 + $0x170] sm:$0xff]
    %v505 = vld [vmem:[#allocation7 + $0x178] sm:$0xff]
    %v506 = vld [vmem:[#allocation7 + $0x180] sm:$0xff]
    %v507 = vld [vmem:[#allocation7 + $0x188] sm:$0xff]
    %v508 = vld [vmem:[#allocation7 + $0x190] sm:$0xff]
    %v509 = vld [vmem:[#allocation7 + $0x198] sm:$0xff]
    %v510 = vld [vmem:[#allocation7 + $0x1a0] sm:$0xff]
    %v511 = vld [vmem:[#allocation7 + $0x1a8] sm:$0xff]
    %v512 = vld [vmem:[#allocation7 + $0x1b0] sm:$0xff]
    %v513 = vld [vmem:[#allocation7 + $0x1b8] sm:$0xff]
    %v514 = vld [vmem:[#allocation7 + $0x1c0] sm:$0xff]
    %v515 = vld [vmem:[#allocation7 + $0x1c8] sm:$0xff]
    %v516 = vld [vmem:[#allocation7 + $0x1d0] sm:$0xff]
    %v517 = vld [vmem:[#allocation7 + $0x1d8] sm:$0xff]
    %v518 = vld [vmem:[#allocation7 + $0x1e0] sm:$0xff]
    %v519 = vld [vmem:[#allocation7 + $0x1e8] sm:$0xff]
    %v520 = vld [vmem:[#allocation7 + $0x1f0] sm:$0xff]
    %v521 = vld [vmem:[#allocation7 + $0x1f8] sm:$0xff]
    %v522 = vld [vmem:[%s6] sm:$0xff]
    %v523 = vld [vmem:[%s6 + $0x8] sm:$0xff]
    %v526 = vperm.slane %v522, 0
    %v527 = vperm.slane %v522, 1
    %v528 = vperm.slane %v522, 2
    %v529 = vperm.slane %v522, 3
    %v530 = vperm.slane %v522, 4
    %v531 = vperm.slane %v522, 5
    %v532 = vperm.slane %v522, 6
    %v533 = vperm.slane %v522, 7
    %v534 = vperm.slane %v523, 0
    %v535 = vperm.slane %v523, 1
    %v536 = vperm.slane %v523, 2
    %v537 = vperm.slane %v523, 3
    %v538 = vperm.slane %v523, 4
    %v539 = vperm.slane %v523, 5
    %v540 = vperm.slane %v523, 6
    %v541 = vperm.slane %v523, 7
    %vm558 = vcmask 261120
    %v560 = vsel %vm558, %v457, 0
    %562 = vmatpush.msra.mxu0 0.0
    %563 = vmatpush.msra.mxu0 0.0
    %564 = vmatpush.msra.mxu0 0.0
    %565 = vmatpush.msra.mxu0 0.0
    %566 = vmatpush.msra.mxu0 0.0
    %567 = vmatpush.msra.mxu0 0.0
    %568 = vmatpush.msra.mxu0 0.0
    %569 = vmatpush.msra.mxu0 0.0
    %570 = vmatpush.msra.mxu0 0.0
    %571 = vmatpush.msra.mxu0 0.0
    %572 = vmatpush.msra.mxu0 0.0
    %573 = vmatpush.msra.mxu0 0.0
    %574 = vmatpush.msra.mxu0 %v506
    %575 = vmatpush.msra.mxu0 %v490
    %576 = vmatpush.msra.mxu0 %v474
    %577 = vmatpush.msra.mxu0 %v458
    %578 = vmatmul.f32.gmra.mxu0 %v560
    %v579 = vpop.f32.mrf.mxu0
    %v580 = vadd.f32 %v526, %v579
    %581 = vdwg.mxu0
    %582 = vmatpush.msra.mxu0 0.0
    %583 = vmatpush.msra.mxu0 0.0
    %584 = vmatpush.msra.mxu0 0.0
    %585 = vmatpush.msra.mxu0 0.0
    %586 = vmatpush.msra.mxu0 0.0
    %587 = vmatpush.msra.mxu0 0.0
    %588 = vmatpush.msra.mxu0 0.0
    %589 = vmatpush.msra.mxu0 0.0
    %590 = vmatpush.msra.mxu0 0.0
    %591 = vmatpush.msra.mxu0 0.0
    %592 = vmatpush.msra.mxu0 0.0
    %593 = vmatpush.msra.mxu0 0.0
    %594 = vmatpush.msra.mxu0 %v507
    %595 = vmatpush.msra.mxu0 %v491
    %596 = vmatpush.msra.mxu0 %v475
    %597 = vmatpush.msra.mxu0 %v459
    %598 = vmatmul.f32.gmra.mxu0 %v560
    %v599 = vpop.f32.mrf.mxu0
    %v600 = vadd.f32 %v527, %v599
    %601 = vdwg.mxu0
    %602 = vmatpush.msra.mxu0 0.0
    %603 = vmatpush.msra.mxu0 0.0
    %604 = vmatpush.msra.mxu0 0.0
    %605 = vmatpush.msra.mxu0 0.0
    %606 = vmatpush.msra.mxu0 0.0
    %607 = vmatpush.msra.mxu0 0.0
    %608 = vmatpush.msra.mxu0 0.0
    %609 = vmatpush.msra.mxu0 0.0
    %610 = vmatpush.msra.mxu0 0.0
    %611 = vmatpush.msra.mxu0 0.0
    %612 = vmatpush.msra.mxu0 0.0
    %613 = vmatpush.msra.mxu0 0.0
    %614 = vmatpush.msra.mxu0 %v508
    %615 = vmatpush.msra.mxu0 %v492
    %616 = vmatpush.msra.mxu0 %v476
    %617 = vmatpush.msra.mxu0 %v460
    %618 = vmatmul.f32.gmra.mxu0 %v560
    %v619 = vpop.f32.mrf.mxu0
    %v620 = vadd.f32 %v528, %v619
    %621 = vdwg.mxu0
    %622 = vmatpush.msra.mxu0 0.0
    %623 = vmatpush.msra.mxu0 0.0
    %624 = vmatpush.msra.mxu0 0.0
    %625 = vmatpush.msra.mxu0 0.0
    %626 = vmatpush.msra.mxu0 0.0
    %627 = vmatpush.msra.mxu0 0.0
    %628 = vmatpush.msra.mxu0 0.0
    %629 = vmatpush.msra.mxu0 0.0
    %630 = vmatpush.msra.mxu0 0.0
    %631 = vmatpush.msra.mxu0 0.0
    %632 = vmatpush.msra.mxu0 0.0
    %633 = vmatpush.msra.mxu0 0.0
    %634 = vmatpush.msra.mxu0 %v509
    %635 = vmatpush.msra.mxu0 %v493
    %636 = vmatpush.msra.mxu0 %v477
    %637 = vmatpush.msra.mxu0 %v461
    %638 = vmatmul.f32.gmra.mxu0 %v560
    %v639 = vpop.f32.mrf.mxu0
    %v640 = vadd.f32 %v529, %v639
    %641 = vdwg.mxu0
    %642 = vmatpush.msra.mxu0 0.0
    %643 = vmatpush.msra.mxu0 0.0
    %644 = vmatpush.msra.mxu0 0.0
    %645 = vmatpush.msra.mxu0 0.0
    %646 = vmatpush.msra.mxu0 0.0
    %647 = vmatpush.msra.mxu0 0.0
    %648 = vmatpush.msra.mxu0 0.0
    %649 = vmatpush.msra.mxu0 0.0
    %650 = vmatpush.msra.mxu0 0.0
    %651 = vmatpush.msra.mxu0 0.0
    %652 = vmatpush.msra.mxu0 0.0
    %653 = vmatpush.msra.mxu0 0.0
    %654 = vmatpush.msra.mxu0 %v510
    %655 = vmatpush.msra.mxu0 %v494
    %656 = vmatpush.msra.mxu0 %v478
    %657 = vmatpush.msra.mxu0 %v462
    %658 = vmatmul.f32.gmra.mxu0 %v560
    %v659 = vpop.f32.mrf.mxu0
    %v660 = vadd.f32 %v530, %v659
    %661 = vdwg.mxu0
    %662 = vmatpush.msra.mxu0 0.0
    %663 = vmatpush.msra.mxu0 0.0
    %664 = vmatpush.msra.mxu0 0.0
    %665 = vmatpush.msra.mxu0 0.0
    %666 = vmatpush.msra.mxu0 0.0
    %667 = vmatpush.msra.mxu0 0.0
    %668 = vmatpush.msra.mxu0 0.0
    %669 = vmatpush.msra.mxu0 0.0
    %670 = vmatpush.msra.mxu0 0.0
    %671 = vmatpush.msra.mxu0 0.0
    %672 = vmatpush.msra.mxu0 0.0
    %673 = vmatpush.msra.mxu0 0.0
    %674 = vmatpush.msra.mxu0 %v511
    %675 = vmatpush.msra.mxu0 %v495
    %676 = vmatpush.msra.mxu0 %v479
    %677 = vmatpush.msra.mxu0 %v463
    %678 = vmatmul.f32.gmra.mxu0 %v560
    %v679 = vpop.f32.mrf.mxu0
    %v680 = vadd.f32 %v531, %v679
    %681 = vdwg.mxu0
    %682 = vmatpush.msra.mxu0 0.0
    %683 = vmatpush.msra.mxu0 0.0
    %684 = vmatpush.msra.mxu0 0.0
    %685 = vmatpush.msra.mxu0 0.0
    %686 = vmatpush.msra.mxu0 0.0
    %687 = vmatpush.msra.mxu0 0.0
    %688 = vmatpush.msra.mxu0 0.0
    %689 = vmatpush.msra.mxu0 0.0
    %690 = vmatpush.msra.mxu0 0.0
    %691 = vmatpush.msra.mxu0 0.0
    %692 = vmatpush.msra.mxu0 0.0
    %693 = vmatpush.msra.mxu0 0.0
    %694 = vmatpush.msra.mxu0 %v512
    %695 = vmatpush.msra.mxu0 %v496
    %696 = vmatpush.msra.mxu0 %v480
    %697 = vmatpush.msra.mxu0 %v464
    %698 = vmatmul.f32.gmra.mxu0 %v560
    %v699 = vpop.f32.mrf.mxu0
    %v700 = vadd.f32 %v532, %v699
    %701 = vdwg.mxu0
    %702 = vmatpush.msra.mxu0 0.0
    %703 = vmatpush.msra.mxu0 0.0
    %704 = vmatpush.msra.mxu0 0.0
    %705 = vmatpush.msra.mxu0 0.0
    %706 = vmatpush.msra.mxu0 0.0
    %707 = vmatpush.msra.mxu0 0.0
    %708 = vmatpush.msra.mxu0 0.0
    %709 = vmatpush.msra.mxu0 0.0
    %710 = vmatpush.msra.mxu0 0.0
    %711 = vmatpush.msra.mxu0 0.0
    %712 = vmatpush.msra.mxu0 0.0
    %713 = vmatpush.msra.mxu0 0.0
    %714 = vmatpush.msra.mxu0 %v513
    %715 = vmatpush.msra.mxu0 %v497
    %716 = vmatpush.msra.mxu0 %v481
    %717 = vmatpush.msra.mxu0 %v465
    %718 = vmatmul.f32.gmra.mxu0 %v560
    %v719 = vpop.f32.mrf.mxu0
    %v720 = vadd.f32 %v533, %v719
    %721 = vdwg.mxu0
    %722 = vmatpush.msra.mxu0 0.0
    %723 = vmatpush.msra.mxu0 0.0
    %724 = vmatpush.msra.mxu0 0.0
    %725 = vmatpush.msra.mxu0 0.0
    %726 = vmatpush.msra.mxu0 0.0
    %727 = vmatpush.msra.mxu0 0.0
    %728 = vmatpush.msra.mxu0 0.0
    %729 = vmatpush.msra.mxu0 0.0
    %730 = vmatpush.msra.mxu0 0.0
    %731 = vmatpush.msra.mxu0 0.0
    %732 = vmatpush.msra.mxu0 0.0
    %733 = vmatpush.msra.mxu0 0.0
    %734 = vmatpush.msra.mxu0 %v514
    %735 = vmatpush.msra.mxu0 %v498
    %736 = vmatpush.msra.mxu0 %v482
    %737 = vmatpush.msra.mxu0 %v466
    %738 = vmatmul.f32.gmra.mxu0 %v560
    %v739 = vpop.f32.mrf.mxu0
    %v740 = vadd.f32 %v534, %v739
    %741 = vdwg.mxu0
    %742 = vmatpush.msra.mxu0 0.0
    %743 = vmatpush.msra.mxu0 0.0
    %744 = vmatpush.msra.mxu0 0.0
    %745 = vmatpush.msra.mxu0 0.0
    %746 = vmatpush.msra.mxu0 0.0
    %747 = vmatpush.msra.mxu0 0.0
    %748 = vmatpush.msra.mxu0 0.0
    %749 = vmatpush.msra.mxu0 0.0
    %750 = vmatpush.msra.mxu0 0.0
    %751 = vmatpush.msra.mxu0 0.0
    %752 = vmatpush.msra.mxu0 0.0
    %753 = vmatpush.msra.mxu0 0.0
    %754 = vmatpush.msra.mxu0 %v515
    %755 = vmatpush.msra.mxu0 %v499
    %756 = vmatpush.msra.mxu0 %v483
    %757 = vmatpush.msra.mxu0 %v467
    %758 = vmatmul.f32.gmra.mxu0 %v560
    %v759 = vpop.f32.mrf.mxu0
    %v760 = vadd.f32 %v535, %v759
    %761 = vdwg.mxu0
    %762 = vmatpush.msra.mxu0 0.0
    %763 = vmatpush.msra.mxu0 0.0
    %764 = vmatpush.msra.mxu0 0.0
    %765 = vmatpush.msra.mxu0 0.0
    %766 = vmatpush.msra.mxu0 0.0
    %767 = vmatpush.msra.mxu0 0.0
    %768 = vmatpush.msra.mxu0 0.0
    %769 = vmatpush.msra.mxu0 0.0
    %770 = vmatpush.msra.mxu0 0.0
    %771 = vmatpush.msra.mxu0 0.0
    %772 = vmatpush.msra.mxu0 0.0
    %773 = vmatpush.msra.mxu0 0.0
    %774 = vmatpush.msra.mxu0 %v516
    %775 = vmatpush.msra.mxu0 %v500
    %776 = vmatpush.msra.mxu0 %v484
    %777 = vmatpush.msra.mxu0 %v468
    %778 = vmatmul.f32.gmra.mxu0 %v560
    %v779 = vpop.f32.mrf.mxu0
    %v780 = vadd.f32 %v536, %v779
    %781 = vdwg.mxu0
    %782 = vmatpush.msra.mxu0 0.0
    %783 = vmatpush.msra.mxu0 0.0
    %784 = vmatpush.msra.mxu0 0.0
    %785 = vmatpush.msra.mxu0 0.0
    %786 = vmatpush.msra.mxu0 0.0
    %787 = vmatpush.msra.mxu0 0.0
    %788 = vmatpush.msra.mxu0 0.0
    %789 = vmatpush.msra.mxu0 0.0
    %790 = vmatpush.msra.mxu0 0.0
    %791 = vmatpush.msra.mxu0 0.0
    %792 = vmatpush.msra.mxu0 0.0
    %793 = vmatpush.msra.mxu0 0.0
    %794 = vmatpush.msra.mxu0 %v517
    %795 = vmatpush.msra.mxu0 %v501
    %796 = vmatpush.msra.mxu0 %v485
    %797 = vmatpush.msra.mxu0 %v469
    %798 = vmatmul.f32.gmra.mxu0 %v560
    %v799 = vpop.f32.mrf.mxu0
    %v800 = vadd.f32 %v537, %v799
    %801 = vdwg.mxu0
    %802 = vmatpush.msra.mxu0 0.0
    %803 = vmatpush.msra.mxu0 0.0
    %804 = vmatpush.msra.mxu0 0.0
    %805 = vmatpush.msra.mxu0 0.0
    %806 = vmatpush.msra.mxu0 0.0
    %807 = vmatpush.msra.mxu0 0.0
    %808 = vmatpush.msra.mxu0 0.0
    %809 = vmatpush.msra.mxu0 0.0
    %810 = vmatpush.msra.mxu0 0.0
    %811 = vmatpush.msra.mxu0 0.0
    %812 = vmatpush.msra.mxu0 0.0
    %813 = vmatpush.msra.mxu0 0.0
    %814 = vmatpush.msra.mxu0 %v518
    %815 = vmatpush.msra.mxu0 %v502
    %816 = vmatpush.msra.mxu0 %v486
    %817 = vmatpush.msra.mxu0 %v470
    %818 = vmatmul.f32.gmra.mxu0 %v560
    %v819 = vpop.f32.mrf.mxu0
    %v820 = vadd.f32 %v538, %v819
    %821 = vdwg.mxu0
    %822 = vmatpush.msra.mxu0 0.0
    %823 = vmatpush.msra.mxu0 0.0
    %824 = vmatpush.msra.mxu0 0.0
    %825 = vmatpush.msra.mxu0 0.0
    %826 = vmatpush.msra.mxu0 0.0
    %827 = vmatpush.msra.mxu0 0.0
    %828 = vmatpush.msra.mxu0 0.0
    %829 = vmatpush.msra.mxu0 0.0
    %830 = vmatpush.msra.mxu0 0.0
    %831 = vmatpush.msra.mxu0 0.0
    %832 = vmatpush.msra.mxu0 0.0
    %833 = vmatpush.msra.mxu0 0.0
    %834 = vmatpush.msra.mxu0 %v519
    %835 = vmatpush.msra.mxu0 %v503
    %836 = vmatpush.msra.mxu0 %v487
    %837 = vmatpush.msra.mxu0 %v471
    %838 = vmatmul.f32.gmra.mxu0 %v560
    %v839 = vpop.f32.mrf.mxu0
    %v840 = vadd.f32 %v539, %v839
    %841 = vdwg.mxu0
    %842 = vmatpush.msra.mxu0 0.0
    %843 = vmatpush.msra.mxu0 0.0
    %844 = vmatpush.msra.mxu0 0.0
    %845 = vmatpush.msra.mxu0 0.0
    %846 = vmatpush.msra.mxu0 0.0
    %847 = vmatpush.msra.mxu0 0.0
    %848 = vmatpush.msra.mxu0 0.0
    %849 = vmatpush.msra.mxu0 0.0
    %850 = vmatpush.msra.mxu0 0.0
    %851 = vmatpush.msra.mxu0 0.0
    %852 = vmatpush.msra.mxu0 0.0
    %853 = vmatpush.msra.mxu0 0.0
    %854 = vmatpush.msra.mxu0 %v520
    %855 = vmatpush.msra.mxu0 %v504
    %856 = vmatpush.msra.mxu0 %v488
    %857 = vmatpush.msra.mxu0 %v472
    %858 = vmatmul.f32.gmra.mxu0 %v560
    %v859 = vpop.f32.mrf.mxu0
    %v860 = vadd.f32 %v540, %v859
    %861 = vdwg.mxu0
    %862 = vmatpush.msra.mxu0 0.0
    %863 = vmatpush.msra.mxu0 0.0
    %864 = vmatpush.msra.mxu0 0.0
    %865 = vmatpush.msra.mxu0 0.0
    %866 = vmatpush.msra.mxu0 0.0
    %867 = vmatpush.msra.mxu0 0.0
    %868 = vmatpush.msra.mxu0 0.0
    %869 = vmatpush.msra.mxu0 0.0
    %870 = vmatpush.msra.mxu0 0.0
    %871 = vmatpush.msra.mxu0 0.0
    %872 = vmatpush.msra.mxu0 0.0
    %873 = vmatpush.msra.mxu0 0.0
    %874 = vmatpush.msra.mxu0 %v521
    %875 = vmatpush.msra.mxu0 %v505
    %876 = vmatpush.msra.mxu0 %v489
    %877 = vmatpush.msra.mxu0 %v473
    %878 = vmatmul.f32.gmra.mxu0 %v560
    %v879 = vpop.f32.mrf.mxu0
    %v880 = vadd.f32 %v541, %v879
    %881 = vdwg.mxu0
    %v882 = vlaneseq
    %v883 = vand.u32 %v882, 127
    %v884 = vadd.s32 %v883, 128
    %v885 = vadd.s32 %v883, 256
    %v886 = vadd.s32 %v883, 384
    %vm887 = vcmask 1041408
    %v888 = vsel %vm887, %v580, inf
    %v889 = vsel %vm887, %v600, inf
    %v890 = vsel %vm887, %v620, inf
    %v891 = vsel %vm887, %v640, inf
    %v892 = vmin.f32 %v888, %v889
    %v893 = vmin.f32 %v890, %v891
    %v894 = vmin.f32 %v892, %v893
    %895 = vmin.xlane.f32.xlu0 %v894
    %v896 = vpop.xlane.xlu0 %895
    %vm897 = vcmp.eq.f32.partialorder %v580, %v896
    %vm898 = vcmp.eq.f32.partialorder %v600, %v896
    %vm899 = vcmp.eq.f32.partialorder %v620, %v896
    %vm900 = vcmp.eq.f32.partialorder %v640, %v896
    %v901 = vsel %vm897, %v883, 512
    %v902 = vsel %vm898, %v884, 512
    %v903 = vsel %vm899, %v885, 512
    %v904 = vsel %vm900, %v886, 512
    %v905 = vsel %vm887, %v901, 2147483647
    %v906 = vsel %vm887, %v902, 2147483647
    %v907 = vsel %vm887, %v903, 2147483647
    %v908 = vsel %vm887, %v904, 2147483647
    %vm909 = vcmp.lt.s32.totalorder %v905, %v906
    %v910 = vsel %vm909, %v905, %v906
    %vm911 = vcmp.lt.s32.totalorder %v907, %v908
    %v912 = vsel %vm911, %v907, %v908
    %vm913 = vcmp.lt.s32.totalorder %v910, %v912
    %v914 = vsel %vm913, %v910, %v912
    %v915 = vand.u32 %v914, 65535
    %v916 = vshra.s32 %v914, 16
    %v917 = vcvt.s32.f32 %v915
    %v918 = vcvt.s32.f32 %v916
    %919 = vmin.xlane.f32.xlu0 %v918
    %v920 = vpop.xlane.xlu0 %919
    %vm921 = vcmp.eq.f32.partialorder %v918, %v920
    %v922 = vsel %vm921, %v917, inf
    %923 = vmin.xlane.f32.xlu0 %v922
    %v924 = vpop.xlane.xlu0 %923
    %v925 = vcvt.f32.s32 %v924
    %v926 = vcvt.f32.s32 %v920
    %v927 = vshll.u32 %v926, 16
    %v928 = vadd.s32 %v927, %v925
    %vm929 = vcmp.eq.s32.totalorder %v883, %v928
    %vm930 = vcmp.eq.s32.totalorder %v884, %v928
    %vm931 = vcmp.eq.s32.totalorder %v885, %v928
    %vm932 = vcmp.eq.s32.totalorder %v886, %v928
    %v933 = vsel %vm929, 1, 0
    %v934 = vsel %vm930, 1, 0
    %v935 = vsel %vm931, 1, 0
    %v936 = vsel %vm932, 1, 0
    %v937 = vcvt.s32.f32 %v933
    %v938 = vcvt.s32.f32 %v934
    %v939 = vcvt.s32.f32 %v935
    %v940 = vcvt.s32.f32 %v936
    %v941 = vsel %vm887, %v660, inf
    %v942 = vsel %vm887, %v680, inf
    %v943 = vsel %vm887, %v700, inf
    %v944 = vsel %vm887, %v720, inf
    %v945 = vmin.f32 %v941, %v942
    %v946 = vmin.f32 %v943, %v944
    %v947 = vmin.f32 %v945, %v946
    %948 = vmin.xlane.f32.xlu0 %v947
    %v949 = vpop.xlane.xlu0 %948
    %vm950 = vcmp.eq.f32.partialorder %v660, %v949
    %vm951 = vcmp.eq.f32.partialorder %v680, %v949
    %vm952 = vcmp.eq.f32.partialorder %v700, %v949
    %vm953 = vcmp.eq.f32.partialorder %v720, %v949
    %v954 = vsel %vm950, %v883, 512
    %v955 = vsel %vm951, %v884, 512
    %v956 = vsel %vm952, %v885, 512
    %v957 = vsel %vm953, %v886, 512
    %v958 = vsel %vm887, %v954, 2147483647
    %v959 = vsel %vm887, %v955, 2147483647
    %v960 = vsel %vm887, %v956, 2147483647
    %v961 = vsel %vm887, %v957, 2147483647
    %vm962 = vcmp.lt.s32.totalorder %v958, %v959
    %v963 = vsel %vm962, %v958, %v959
    %vm964 = vcmp.lt.s32.totalorder %v960, %v961
    %v965 = vsel %vm964, %v960, %v961
    %vm966 = vcmp.lt.s32.totalorder %v963, %v965
    %v967 = vsel %vm966, %v963, %v965
    %v968 = vand.u32 %v967, 65535
    %v969 = vshra.s32 %v967, 16
    %v970 = vcvt.s32.f32 %v968
    %v971 = vcvt.s32.f32 %v969
    %972 = vmin.xlane.f32.xlu0 %v971
    %v973 = vpop.xlane.xlu0 %972
    %vm974 = vcmp.eq.f32.partialorder %v971, %v973
    %v975 = vsel %vm974, %v970, inf
    %976 = vmin.xlane.f32.xlu0 %v975
    %v977 = vpop.xlane.xlu0 %976
    %v978 = vcvt.f32.s32 %v977
    %v979 = vcvt.f32.s32 %v973
    %v980 = vshll.u32 %v979, 16
    %v981 = vadd.s32 %v980, %v978
    %vm982 = vcmp.eq.s32.totalorder %v883, %v981
    %vm983 = vcmp.eq.s32.totalorder %v884, %v981
    %vm984 = vcmp.eq.s32.totalorder %v885, %v981
    %vm985 = vcmp.eq.s32.totalorder %v886, %v981
    %v986 = vsel %vm982, 1, 0
    %v987 = vsel %vm983, 1, 0
    %v988 = vsel %vm984, 1, 0
    %v989 = vsel %vm985, 1, 0
    %v990 = vcvt.s32.f32 %v986
    %v991 = vcvt.s32.f32 %v987
    %v992 = vcvt.s32.f32 %v988
    %v993 = vcvt.s32.f32 %v989
    %v994 = vsel %vm887, %v740, inf
    %v995 = vsel %vm887, %v760, inf
    %v996 = vsel %vm887, %v780, inf
    %v997 = vsel %vm887, %v800, inf
    %v998 = vmin.f32 %v994, %v995
    %v999 = vmin.f32 %v996, %v997
    %v1000 = vmin.f32 %v998, %v999
    %1001 = vmin.xlane.f32.xlu0 %v1000
    %v1002 = vpop.xlane.xlu0 %1001
    %vm1003 = vcmp.eq.f32.partialorder %v740, %v1002
    %vm1004 = vcmp.eq.f32.partialorder %v760, %v1002
    %vm1005 = vcmp.eq.f32.partialorder %v780, %v1002
    %vm1006 = vcmp.eq.f32.partialorder %v800, %v1002
    %v1007 = vsel %vm1003, %v883, 512
    %v1008 = vsel %vm1004, %v884, 512
    %v1009 = vsel %vm1005, %v885, 512
    %v1010 = vsel %vm1006, %v886, 512
    %v1011 = vsel %vm887, %v1007, 2147483647
    %v1012 = vsel %vm887, %v1008, 2147483647
    %v1013 = vsel %vm887, %v1009, 2147483647
    %v1014 = vsel %vm887, %v1010, 2147483647
    %vm1015 = vcmp.lt.s32.totalorder %v1011, %v1012
    %v1016 = vsel %vm1015, %v1011, %v1012
    %vm1017 = vcmp.lt.s32.totalorder %v1013, %v1014
    %v1018 = vsel %vm1017, %v1013, %v1014
    %vm1019 = vcmp.lt.s32.totalorder %v1016, %v1018
    %v1020 = vsel %vm1019, %v1016, %v1018
    %v1021 = vand.u32 %v1020, 65535
    %v1022 = vshra.s32 %v1020, 16
    %v1023 = vcvt.s32.f32 %v1021
    %v1024 = vcvt.s32.f32 %v1022
    %1025 = vmin.xlane.f32.xlu0 %v1024
    %v1026 = vpop.xlane.xlu0 %1025
    %vm1027 = vcmp.eq.f32.partialorder %v1024, %v1026
    %v1028 = vsel %vm1027, %v1023, inf
    %1029 = vmin.xlane.f32.xlu0 %v1028
    %v1030 = vpop.xlane.xlu0 %1029
    %v1031 = vcvt.f32.s32 %v1030
    %v1032 = vcvt.f32.s32 %v1026
    %v1033 = vshll.u32 %v1032, 16
    %v1034 = vadd.s32 %v1033, %v1031
    %vm1035 = vcmp.eq.s32.totalorder %v883, %v1034
    %vm1036 = vcmp.eq.s32.totalorder %v884, %v1034
    %vm1037 = vcmp.eq.s32.totalorder %v885, %v1034
    %vm1038 = vcmp.eq.s32.totalorder %v886, %v1034
    %v1039 = vsel %vm1035, 1, 0
    %v1040 = vsel %vm1036, 1, 0
    %v1041 = vsel %vm1037, 1, 0
    %v1042 = vsel %vm1038, 1, 0
    %v1043 = vcvt.s32.f32 %v1039
    %v1044 = vcvt.s32.f32 %v1040
    %v1045 = vcvt.s32.f32 %v1041
    %v1046 = vcvt.s32.f32 %v1042
    %v1047 = vsel %vm887, %v820, inf
    %v1048 = vsel %vm887, %v840, inf
    %v1049 = vsel %vm887, %v860, inf
    %v1050 = vsel %vm887, %v880, inf
    %v1051 = vmin.f32 %v1047, %v1048
    %v1052 = vmin.f32 %v1049, %v1050
    %v1053 = vmin.f32 %v1051, %v1052
    %1054 = vmin.xlane.f32.xlu0 %v1053
    %v1055 = vpop.xlane.xlu0 %1054
    %vm1056 = vcmp.eq.f32.partialorder %v820, %v1055
    %vm1057 = vcmp.eq.f32.partialorder %v840, %v1055
    %vm1058 = vcmp.eq.f32.partialorder %v860, %v1055
    %vm1059 = vcmp.eq.f32.partialorder %v880, %v1055
    %v1060 = vsel %vm1056, %v883, 512
    %v1061 = vsel %vm1057, %v884, 512
    %v1062 = vsel %vm1058, %v885, 512
    %v1063 = vsel %vm1059, %v886, 512
    %v1064 = vsel %vm887, %v1060, 2147483647
    %v1065 = vsel %vm887, %v1061, 2147483647
    %v1066 = vsel %vm887, %v1062, 2147483647
    %v1067 = vsel %vm887, %v1063, 2147483647
    %vm1068 = vcmp.lt.s32.totalorder %v1064, %v1065
    %v1069 = vsel %vm1068, %v1064, %v1065
    %vm1070 = vcmp.lt.s32.totalorder %v1066, %v1067
    %v1071 = vsel %vm1070, %v1066, %v1067
    %vm1072 = vcmp.lt.s32.totalorder %v1069, %v1071
    %v1073 = vsel %vm1072, %v1069, %v1071
    %v1074 = vand.u32 %v1073, 65535
    %v1075 = vshra.s32 %v1073, 16
    %v1076 = vcvt.s32.f32 %v1074
    %v1077 = vcvt.s32.f32 %v1075
    %1078 = vmin.xlane.f32.xlu0 %v1077
    %v1079 = vpop.xlane.xlu0 %1078
    %vm1080 = vcmp.eq.f32.partialorder %v1077, %v1079
    %v1081 = vsel %vm1080, %v1076, inf
    %1082 = vmin.xlane.f32.xlu0 %v1081
    %v1083 = vpop.xlane.xlu0 %1082
    %v1084 = vcvt.f32.s32 %v1083
    %v1085 = vcvt.f32.s32 %v1079
    %v1086 = vshll.u32 %v1085, 16
    %v1087 = vadd.s32 %v1086, %v1084
    %vm1088 = vcmp.eq.s32.totalorder %v883, %v1087
    %vm1089 = vcmp.eq.s32.totalorder %v884, %v1087
    %vm1090 = vcmp.eq.s32.totalorder %v885, %v1087
    %vm1091 = vcmp.eq.s32.totalorder %v886, %v1087
    %v1092 = vsel %vm1088, 1, 0
    %v1093 = vsel %vm1089, 1, 0
    %v1094 = vsel %vm1090, 1, 0
    %v1095 = vsel %vm1091, 1, 0
    %v1096 = vcvt.s32.f32 %v1092
    %v1097 = vcvt.s32.f32 %v1093
    %v1098 = vcvt.s32.f32 %v1094
    %v1099 = vcvt.s32.f32 %v1095
    %v1100 = vld [vmem:[#allocation9] sm:$0xff]
    %v1101 = vld [vmem:[#allocation9 + $0x8] sm:$0xff]
    %v1102 = vld [vmem:[#allocation9 + $0x10] sm:$0xff]
    %v1103 = vld [vmem:[#allocation9 + $0x18] sm:$0xff]
    %v1104 = vld [vmem:[#allocation9 + $0x20] sm:$0xff]
    %v1105 = vld [vmem:[#allocation9 + $0x28] sm:$0xff]
    %v1106 = vld [vmem:[#allocation9 + $0x30] sm:$0xff]
    %v1107 = vld [vmem:[#allocation9 + $0x38] sm:$0xff]
    %v1108 = vld [vmem:[#allocation9 + $0x40] sm:$0xff]
    %v1109 = vld [vmem:[#allocation9 + $0x48] sm:$0xff]
    %v1110 = vld [vmem:[#allocation9 + $0x50] sm:$0xff]
    %v1111 = vld [vmem:[#allocation9 + $0x58] sm:$0xff]
    %v1112 = vld [vmem:[#allocation9 + $0x60] sm:$0xff]
    %v1113 = vld [vmem:[#allocation9 + $0x68] sm:$0xff]
    %v1114 = vld [vmem:[#allocation9 + $0x70] sm:$0xff]
    %v1115 = vld [vmem:[#allocation9 + $0x78] sm:$0xff]
    %v1116 = vld [vmem:[#allocation9 + $0x80] sm:$0xff]
    %v1117 = vld [vmem:[#allocation9 + $0x88] sm:$0xff]
    %v1118 = vld [vmem:[#allocation9 + $0x90] sm:$0xff]
    %v1119 = vld [vmem:[#allocation9 + $0x98] sm:$0xff]
    %v1120 = vld [vmem:[#allocation9 + $0xa0] sm:$0xff]
    %v1121 = vld [vmem:[#allocation9 + $0xa8] sm:$0xff]
    %v1122 = vld [vmem:[#allocation9 + $0xb0] sm:$0xff]
    %v1123 = vld [vmem:[#allocation9 + $0xb8] sm:$0xff]
    %v1124 = vld [vmem:[#allocation9 + $0xc0] sm:$0xff]
    %v1125 = vld [vmem:[#allocation9 + $0xc8] sm:$0xff]
    %v1126 = vld [vmem:[#allocation9 + $0xd0] sm:$0xff]
    %v1127 = vld [vmem:[#allocation9 + $0xd8] sm:$0xff]
    %v1128 = vld [vmem:[#allocation9 + $0xe0] sm:$0xff]
    %v1129 = vld [vmem:[#allocation9 + $0xe8] sm:$0xff]
    %v1130 = vld [vmem:[#allocation9 + $0xf0] sm:$0xff]
    %v1131 = vld [vmem:[#allocation9 + $0xf8] sm:$0xff]
    %v1132 = vld [vmem:[#allocation9 + $0x100] sm:$0xff]
    %v1133 = vld [vmem:[#allocation9 + $0x108] sm:$0xff]
    %v1134 = vld [vmem:[#allocation9 + $0x110] sm:$0xff]
    %v1135 = vld [vmem:[#allocation9 + $0x118] sm:$0xff]
    %v1136 = vld [vmem:[#allocation9 + $0x120] sm:$0xff]
    %v1137 = vld [vmem:[#allocation9 + $0x128] sm:$0xff]
    %v1138 = vld [vmem:[#allocation9 + $0x130] sm:$0xff]
    %v1139 = vld [vmem:[#allocation9 + $0x138] sm:$0xff]
    %v1140 = vld [vmem:[#allocation9 + $0x140] sm:$0xff]
    %v1141 = vld [vmem:[#allocation9 + $0x148] sm:$0xff]
    %v1142 = vld [vmem:[#allocation9 + $0x150] sm:$0xff]
    %v1143 = vld [vmem:[#allocation9 + $0x158] sm:$0xff]
    %v1144 = vld [vmem:[#allocation9 + $0x160] sm:$0xff]
    %v1145 = vld [vmem:[#allocation9 + $0x168] sm:$0xff]
    %v1146 = vld [vmem:[#allocation9 + $0x170] sm:$0xff]
    %v1147 = vld [vmem:[#allocation9 + $0x178] sm:$0xff]
    %v1148 = vld [vmem:[#allocation9 + $0x180] sm:$0xff]
    %v1149 = vld [vmem:[#allocation9 + $0x188] sm:$0xff]
    %v1150 = vld [vmem:[#allocation9 + $0x190] sm:$0xff]
    %v1151 = vld [vmem:[#allocation9 + $0x198] sm:$0xff]
    %v1152 = vld [vmem:[#allocation9 + $0x1a0] sm:$0xff]
    %v1153 = vld [vmem:[#allocation9 + $0x1a8] sm:$0xff]
    %v1154 = vld [vmem:[#allocation9 + $0x1b0] sm:$0xff]
    %v1155 = vld [vmem:[#allocation9 + $0x1b8] sm:$0xff]
    %v1156 = vld [vmem:[#allocation9 + $0x1c0] sm:$0xff]
    %v1157 = vld [vmem:[#allocation9 + $0x1c8] sm:$0xff]
    %v1158 = vld [vmem:[#allocation9 + $0x1d0] sm:$0xff]
    %v1159 = vld [vmem:[#allocation9 + $0x1d8] sm:$0xff]
    %v1160 = vld [vmem:[#allocation9 + $0x1e0] sm:$0xff]
    %v1161 = vld [vmem:[#allocation9 + $0x1e8] sm:$0xff]
    %v1162 = vld [vmem:[#allocation9 + $0x1f0] sm:$0xff]
    %v1163 = vld [vmem:[#allocation9 + $0x1f8] sm:$0xff]
    %v1164 = vld [vmem:[#allocation9 + $0x200] sm:$0xff]
    %v1165 = vld [vmem:[#allocation9 + $0x208] sm:$0xff]
    %v1166 = vld [vmem:[#allocation9 + $0x210] sm:$0xff]
    %v1167 = vld [vmem:[#allocation9 + $0x218] sm:$0xff]
    %v1168 = vld [vmem:[#allocation9 + $0x220] sm:$0xff]
    %v1169 = vld [vmem:[#allocation9 + $0x228] sm:$0xff]
    %v1170 = vld [vmem:[#allocation9 + $0x230] sm:$0xff]
    %v1171 = vld [vmem:[#allocation9 + $0x238] sm:$0xff]
    %v1172 = vld [vmem:[#allocation9 + $0x240] sm:$0xff]
    %v1173 = vld [vmem:[#allocation9 + $0x248] sm:$0xff]
    %v1174 = vld [vmem:[#allocation9 + $0x250] sm:$0xff]
    %v1175 = vld [vmem:[#allocation9 + $0x258] sm:$0xff]
    %v1176 = vld [vmem:[#allocation9 + $0x260] sm:$0xff]
    %v1177 = vld [vmem:[#allocation9 + $0x268] sm:$0xff]
    %v1178 = vld [vmem:[#allocation9 + $0x270] sm:$0xff]
    %v1179 = vld [vmem:[#allocation9 + $0x278] sm:$0xff]
    %v1180 = vld [vmem:[#allocation9 + $0x280] sm:$0xff]
    %v1181 = vld [vmem:[#allocation9 + $0x288] sm:$0xff]
    %v1182 = vld [vmem:[#allocation9 + $0x290] sm:$0xff]
    %v1183 = vld [vmem:[#allocation9 + $0x298] sm:$0xff]
    %v1184 = vld [vmem:[#allocation9 + $0x2a0] sm:$0xff]
    %v1185 = vld [vmem:[#allocation9 + $0x2a8] sm:$0xff]
    %v1186 = vld [vmem:[#allocation9 + $0x2b0] sm:$0xff]
    %v1187 = vld [vmem:[#allocation9 + $0x2b8] sm:$0xff]
    %v1188 = vld [vmem:[#allocation9 + $0x2c0] sm:$0xff]
    %v1189 = vld [vmem:[#allocation9 + $0x2c8] sm:$0xff]
    %v1190 = vld [vmem:[#allocation9 + $0x2d0] sm:$0xff]
    %v1191 = vld [vmem:[#allocation9 + $0x2d8] sm:$0xff]
    %v1192 = vld [vmem:[#allocation9 + $0x2e0] sm:$0xff]
    %v1193 = vld [vmem:[#allocation9 + $0x2e8] sm:$0xff]
    %v1194 = vld [vmem:[#allocation9 + $0x2f0] sm:$0xff]
    %v1195 = vld [vmem:[#allocation9 + $0x2f8] sm:$0xff]
    %v1196 = vld [vmem:[#allocation9 + $0x300] sm:$0xff]
    %v1197 = vld [vmem:[#allocation9 + $0x308] sm:$0xff]
    %v1198 = vld [vmem:[#allocation9 + $0x310] sm:$0xff]
    %v1199 = vld [vmem:[#allocation9 + $0x318] sm:$0xff]
    %v1200 = vld [vmem:[#allocation9 + $0x320] sm:$0xff]
    %v1201 = vld [vmem:[#allocation9 + $0x328] sm:$0xff]
    %v1202 = vld [vmem:[#allocation9 + $0x330] sm:$0xff]
    %v1203 = vld [vmem:[#allocation9 + $0x338] sm:$0xff]
    %v1204 = vld [vmem:[#allocation9 + $0x340] sm:$0xff]
    %v1205 = vld [vmem:[#allocation9 + $0x348] sm:$0xff]
    %v1206 = vld [vmem:[#allocation9 + $0x350] sm:$0xff]
    %v1207 = vld [vmem:[#allocation9 + $0x358] sm:$0xff]
    %v1208 = vld [vmem:[#allocation9 + $0x360] sm:$0xff]
    %v1209 = vld [vmem:[#allocation9 + $0x368] sm:$0xff]
    %v1210 = vld [vmem:[#allocation9 + $0x370] sm:$0xff]
    %v1211 = vld [vmem:[#allocation9 + $0x378] sm:$0xff]
    %v1212 = vld [vmem:[#allocation9 + $0x380] sm:$0xff]
    %v1213 = vld [vmem:[#allocation9 + $0x388] sm:$0xff]
    %v1214 = vld [vmem:[#allocation9 + $0x390] sm:$0xff]
    %v1215 = vld [vmem:[#allocation9 + $0x398] sm:$0xff]
    %v1216 = vld [vmem:[#allocation9 + $0x3a0] sm:$0xff]
    %v1217 = vld [vmem:[#allocation9 + $0x3a8] sm:$0xff]
    %v1218 = vld [vmem:[#allocation9 + $0x3b0] sm:$0xff]
    %v1219 = vld [vmem:[#allocation9 + $0x3b8] sm:$0xff]
    %v1220 = vld [vmem:[#allocation9 + $0x3c0] sm:$0xff]
    %v1221 = vld [vmem:[#allocation9 + $0x3c8] sm:$0xff]
    %v1222 = vld [vmem:[#allocation9 + $0x3d0] sm:$0xff]
    %v1223 = vld [vmem:[#allocation9 + $0x3d8] sm:$0xff]
    %v1224 = vld [vmem:[#allocation9 + $0x3e0] sm:$0xff]
    %v1225 = vld [vmem:[#allocation9 + $0x3e8] sm:$0xff]
    %v1226 = vld [vmem:[#allocation9 + $0x3f0] sm:$0xff]
    %v1227 = vld [vmem:[#allocation9 + $0x3f8] sm:$0xff]
    %v1228 = vld [vmem:[#allocation9 + $0x400] sm:$0xff]
    %v1229 = vld [vmem:[#allocation9 + $0x408] sm:$0xff]
    %v1230 = vld [vmem:[#allocation9 + $0x410] sm:$0xff]
    %v1231 = vld [vmem:[#allocation9 + $0x418] sm:$0xff]
    %v1232 = vld [vmem:[#allocation9 + $0x420] sm:$0xff]
    %v1233 = vld [vmem:[#allocation9 + $0x428] sm:$0xff]
    %v1234 = vld [vmem:[#allocation9 + $0x430] sm:$0xff]
    %v1235 = vld [vmem:[#allocation9 + $0x438] sm:$0xff]
    %v1236 = vld [vmem:[#allocation9 + $0x440] sm:$0xff]
    %v1237 = vld [vmem:[#allocation9 + $0x448] sm:$0xff]
    %v1238 = vld [vmem:[#allocation9 + $0x450] sm:$0xff]
    %v1239 = vld [vmem:[#allocation9 + $0x458] sm:$0xff]
    %v1240 = vld [vmem:[#allocation9 + $0x460] sm:$0xff]
    %v1241 = vld [vmem:[#allocation9 + $0x468] sm:$0xff]
    %v1242 = vld [vmem:[#allocation9 + $0x470] sm:$0xff]
    %v1243 = vld [vmem:[#allocation9 + $0x478] sm:$0xff]
    %v1244 = vld [vmem:[#allocation9 + $0x480] sm:$0xff]
    %v1245 = vld [vmem:[#allocation9 + $0x488] sm:$0xff]
    %v1246 = vld [vmem:[#allocation9 + $0x490] sm:$0xff]
    %v1247 = vld [vmem:[#allocation9 + $0x498] sm:$0xff]
    %v1248 = vld [vmem:[#allocation9 + $0x4a0] sm:$0xff]
    %v1249 = vld [vmem:[#allocation9 + $0x4a8] sm:$0xff]
    %v1250 = vld [vmem:[#allocation9 + $0x4b0] sm:$0xff]
    %v1251 = vld [vmem:[#allocation9 + $0x4b8] sm:$0xff]
    %v1252 = vld [vmem:[#allocation9 + $0x4c0] sm:$0xff]
    %v1253 = vld [vmem:[#allocation9 + $0x4c8] sm:$0xff]
    %v1254 = vld [vmem:[#allocation9 + $0x4d0] sm:$0xff]
    %v1255 = vld [vmem:[#allocation9 + $0x4d8] sm:$0xff]
    %v1256 = vld [vmem:[#allocation9 + $0x4e0] sm:$0xff]
    %v1257 = vld [vmem:[#allocation9 + $0x4e8] sm:$0xff]
    %v1258 = vld [vmem:[#allocation9 + $0x4f0] sm:$0xff]
    %v1259 = vld [vmem:[#allocation9 + $0x4f8] sm:$0xff]
    %v1260 = vld [vmem:[#allocation9 + $0x500] sm:$0xff]
    %v1261 = vld [vmem:[#allocation9 + $0x508] sm:$0xff]
    %v1262 = vld [vmem:[#allocation9 + $0x510] sm:$0xff]
    %v1263 = vld [vmem:[#allocation9 + $0x518] sm:$0xff]
    %v1264 = vld [vmem:[#allocation9 + $0x520] sm:$0xff]
    %v1265 = vld [vmem:[#allocation9 + $0x528] sm:$0xff]
    %v1266 = vld [vmem:[#allocation9 + $0x530] sm:$0xff]
    %v1267 = vld [vmem:[#allocation9 + $0x538] sm:$0xff]
    %v1268 = vld [vmem:[#allocation9 + $0x540] sm:$0xff]
    %v1269 = vld [vmem:[#allocation9 + $0x548] sm:$0xff]
    %v1270 = vld [vmem:[#allocation9 + $0x550] sm:$0xff]
    %v1271 = vld [vmem:[#allocation9 + $0x558] sm:$0xff]
    %v1272 = vld [vmem:[#allocation9 + $0x560] sm:$0xff]
    %v1273 = vld [vmem:[#allocation9 + $0x568] sm:$0xff]
    %v1274 = vld [vmem:[#allocation9 + $0x570] sm:$0xff]
    %v1275 = vld [vmem:[#allocation9 + $0x578] sm:$0xff]
    %v1276 = vld [vmem:[#allocation9 + $0x580] sm:$0xff]
    %v1277 = vld [vmem:[#allocation9 + $0x588] sm:$0xff]
    %v1278 = vld [vmem:[#allocation9 + $0x590] sm:$0xff]
    %v1279 = vld [vmem:[#allocation9 + $0x598] sm:$0xff]
    %v1280 = vld [vmem:[#allocation9 + $0x5a0] sm:$0xff]
    %v1281 = vld [vmem:[#allocation9 + $0x5a8] sm:$0xff]
    %v1282 = vld [vmem:[#allocation9 + $0x5b0] sm:$0xff]
    %v1283 = vld [vmem:[#allocation9 + $0x5b8] sm:$0xff]
    %v1284 = vld [vmem:[#allocation9 + $0x5c0] sm:$0xff]
    %v1285 = vld [vmem:[#allocation9 + $0x5c8] sm:$0xff]
    %v1286 = vld [vmem:[#allocation9 + $0x5d0] sm:$0xff]
    %v1287 = vld [vmem:[#allocation9 + $0x5d8] sm:$0xff]
    %v1288 = vld [vmem:[#allocation9 + $0x5e0] sm:$0xff]
    %v1289 = vld [vmem:[#allocation9 + $0x5e8] sm:$0xff]
    %v1290 = vld [vmem:[#allocation9 + $0x5f0] sm:$0xff]
    %v1291 = vld [vmem:[#allocation9 + $0x5f8] sm:$0xff]
    %v1292 = vld [vmem:[#allocation9 + $0x600] sm:$0xff]
    %v1293 = vld [vmem:[#allocation9 + $0x608] sm:$0xff]
    %v1294 = vld [vmem:[#allocation9 + $0x610] sm:$0xff]
    %v1295 = vld [vmem:[#allocation9 + $0x618] sm:$0xff]
    %v1296 = vld [vmem:[#allocation9 + $0x620] sm:$0xff]
    %v1297 = vld [vmem:[#allocation9 + $0x628] sm:$0xff]
    %v1298 = vld [vmem:[#allocation9 + $0x630] sm:$0xff]
    %v1299 = vld [vmem:[#allocation9 + $0x638] sm:$0xff]
    %v1300 = vld [vmem:[#allocation9 + $0x640] sm:$0xff]
    %v1301 = vld [vmem:[#allocation9 + $0x648] sm:$0xff]
    %v1302 = vld [vmem:[#allocation9 + $0x650] sm:$0xff]
    %v1303 = vld [vmem:[#allocation9 + $0x658] sm:$0xff]
    %v1304 = vld [vmem:[#allocation9 + $0x660] sm:$0xff]
    %v1305 = vld [vmem:[#allocation9 + $0x668] sm:$0xff]
    %v1306 = vld [vmem:[#allocation9 + $0x670] sm:$0xff]
    %v1307 = vld [vmem:[#allocation9 + $0x678] sm:$0xff]
    %v1308 = vld [vmem:[#allocation9 + $0x680] sm:$0xff]
    %v1309 = vld [vmem:[#allocation9 + $0x688] sm:$0xff]
    %v1310 = vld [vmem:[#allocation9 + $0x690] sm:$0xff]
    %v1311 = vld [vmem:[#allocation9 + $0x698] sm:$0xff]
    %v1312 = vld [vmem:[#allocation9 + $0x6a0] sm:$0xff]
    %v1313 = vld [vmem:[#allocation9 + $0x6a8] sm:$0xff]
    %v1314 = vld [vmem:[#allocation9 + $0x6b0] sm:$0xff]
    %v1315 = vld [vmem:[#allocation9 + $0x6b8] sm:$0xff]
    %v1316 = vld [vmem:[#allocation9 + $0x6c0] sm:$0xff]
    %v1317 = vld [vmem:[#allocation9 + $0x6c8] sm:$0xff]
    %v1318 = vld [vmem:[#allocation9 + $0x6d0] sm:$0xff]
    %v1319 = vld [vmem:[#allocation9 + $0x6d8] sm:$0xff]
    %v1320 = vld [vmem:[#allocation9 + $0x6e0] sm:$0xff]
    %v1321 = vld [vmem:[#allocation9 + $0x6e8] sm:$0xff]
    %v1322 = vld [vmem:[#allocation9 + $0x6f0] sm:$0xff]
    %v1323 = vld [vmem:[#allocation9 + $0x6f8] sm:$0xff]
    %v1324 = vld [vmem:[#allocation9 + $0x700] sm:$0xff]
    %v1325 = vld [vmem:[#allocation9 + $0x708] sm:$0xff]
    %v1326 = vld [vmem:[#allocation9 + $0x710] sm:$0xff]
    %v1327 = vld [vmem:[#allocation9 + $0x718] sm:$0xff]
    %v1328 = vld [vmem:[#allocation9 + $0x720] sm:$0xff]
    %v1329 = vld [vmem:[#allocation9 + $0x728] sm:$0xff]
    %v1330 = vld [vmem:[#allocation9 + $0x730] sm:$0xff]
    %v1331 = vld [vmem:[#allocation9 + $0x738] sm:$0xff]
    %v1332 = vld [vmem:[#allocation9 + $0x740] sm:$0xff]
    %v1333 = vld [vmem:[#allocation9 + $0x748] sm:$0xff]
    %v1334 = vld [vmem:[#allocation9 + $0x750] sm:$0xff]
    %v1335 = vld [vmem:[#allocation9 + $0x758] sm:$0xff]
    %v1336 = vld [vmem:[#allocation9 + $0x760] sm:$0xff]
    %v1337 = vld [vmem:[#allocation9 + $0x768] sm:$0xff]
    %v1338 = vld [vmem:[#allocation9 + $0x770] sm:$0xff]
    %v1339 = vld [vmem:[#allocation9 + $0x778] sm:$0xff]
    %v1340 = vld [vmem:[#allocation9 + $0x780] sm:$0xff]
    %v1341 = vld [vmem:[#allocation9 + $0x788] sm:$0xff]
    %v1342 = vld [vmem:[#allocation9 + $0x790] sm:$0xff]
    %v1343 = vld [vmem:[#allocation9 + $0x798] sm:$0xff]
    %v1344 = vld [vmem:[#allocation9 + $0x7a0] sm:$0xff]
    %v1345 = vld [vmem:[#allocation9 + $0x7a8] sm:$0xff]
    %v1346 = vld [vmem:[#allocation9 + $0x7b0] sm:$0xff]
    %v1347 = vld [vmem:[#allocation9 + $0x7b8] sm:$0xff]
    %v1348 = vld [vmem:[#allocation9 + $0x7c0] sm:$0xff]
    %v1349 = vld [vmem:[#allocation9 + $0x7c8] sm:$0xff]
    %v1350 = vld [vmem:[#allocation9 + $0x7d0] sm:$0xff]
    %v1351 = vld [vmem:[#allocation9 + $0x7d8] sm:$0xff]
    %v1352 = vld [vmem:[#allocation9 + $0x7e0] sm:$0xff]
    %v1353 = vld [vmem:[#allocation9 + $0x7e8] sm:$0xff]
    %v1354 = vld [vmem:[#allocation9 + $0x7f0] sm:$0xff]
    %v1355 = vld [vmem:[#allocation9 + $0x7f8] sm:$0xff]
    %1356 = vmatpush.msra.mxu0 %v1115
    %1357 = vmatpush.msra.mxu0 %v1114
    %1358 = vmatpush.msra.mxu0 %v1113
    %1359 = vmatpush.msra.mxu0 %v1112
    %1360 = vmatpush.msra.mxu0 %v1111
    %1361 = vmatpush.msra.mxu0 %v1110
    %1362 = vmatpush.msra.mxu0 %v1109
    %1363 = vmatpush.msra.mxu0 %v1108
    %1364 = vmatpush.msra.mxu0 %v1107
    %1365 = vmatpush.msra.mxu0 %v1106
    %1366 = vmatpush.msra.mxu0 %v1105
    %1367 = vmatpush.msra.mxu0 %v1104
    %1368 = vmatpush.msra.mxu0 %v1103
    %1369 = vmatpush.msra.mxu0 %v1102
    %1370 = vmatpush.msra.mxu0 %v1101
    %1371 = vmatpush.msra.mxu0 %v1100
    %1372 = vmatmul.f32.gmra.mxu0 %v937
    %v1373 = vpop.f32.mrf.mxu0
    %v1374 = vadd.f32 0.0, %v1373
    %1375 = vdwg.mxu0
    %1376 = vmatpush.msra.mxu0 %v1131
    %1377 = vmatpush.msra.mxu0 %v1130
    %1378 = vmatpush.msra.mxu0 %v1129
    %1379 = vmatpush.msra.mxu0 %v1128
    %1380 = vmatpush.msra.mxu0 %v1127
    %1381 = vmatpush.msra.mxu0 %v1126
    %1382 = vmatpush.msra.mxu0 %v1125
    %1383 = vmatpush.msra.mxu0 %v1124
    %1384 = vmatpush.msra.mxu0 %v1123
    %1385 = vmatpush.msra.mxu0 %v1122
    %1386 = vmatpush.msra.mxu0 %v1121
    %1387 = vmatpush.msra.mxu0 %v1120
    %1388 = vmatpush.msra.mxu0 %v1119
    %1389 = vmatpush.msra.mxu0 %v1118
    %1390 = vmatpush.msra.mxu0 %v1117
    %1391 = vmatpush.msra.mxu0 %v1116
    %1392 = vmatmul.f32.gmra.mxu0 %v938
    %v1393 = vpop.f32.mrf.mxu0
    %v1394 = vadd.f32 %v1374, %v1393
    %1395 = vdwg.mxu0
    %1396 = vmatpush.msra.mxu0 %v1147
    %1397 = vmatpush.msra.mxu0 %v1146
    %1398 = vmatpush.msra.mxu0 %v1145
    %1399 = vmatpush.msra.mxu0 %v1144
    %1400 = vmatpush.msra.mxu0 %v1143
    %1401 = vmatpush.msra.mxu0 %v1142
    %1402 = vmatpush.msra.mxu0 %v1141
    %1403 = vmatpush.msra.mxu0 %v1140
    %1404 = vmatpush.msra.mxu0 %v1139
    %1405 = vmatpush.msra.mxu0 %v1138
    %1406 = vmatpush.msra.mxu0 %v1137
    %1407 = vmatpush.msra.mxu0 %v1136
    %1408 = vmatpush.msra.mxu0 %v1135
    %1409 = vmatpush.msra.mxu0 %v1134
    %1410 = vmatpush.msra.mxu0 %v1133
    %1411 = vmatpush.msra.mxu0 %v1132
    %1412 = vmatmul.f32.gmra.mxu0 %v939
    %v1413 = vpop.f32.mrf.mxu0
    %v1414 = vadd.f32 %v1394, %v1413
    %1415 = vdwg.mxu0
    %1416 = vmatpush.msra.mxu0 %v1163
    %1417 = vmatpush.msra.mxu0 %v1162
    %1418 = vmatpush.msra.mxu0 %v1161
    %1419 = vmatpush.msra.mxu0 %v1160
    %1420 = vmatpush.msra.mxu0 %v1159
    %1421 = vmatpush.msra.mxu0 %v1158
    %1422 = vmatpush.msra.mxu0 %v1157
    %1423 = vmatpush.msra.mxu0 %v1156
    %1424 = vmatpush.msra.mxu0 %v1155
    %1425 = vmatpush.msra.mxu0 %v1154
    %1426 = vmatpush.msra.mxu0 %v1153
    %1427 = vmatpush.msra.mxu0 %v1152
    %1428 = vmatpush.msra.mxu0 %v1151
    %1429 = vmatpush.msra.mxu0 %v1150
    %1430 = vmatpush.msra.mxu0 %v1149
    %1431 = vmatpush.msra.mxu0 %v1148
    %1432 = vmatmul.f32.gmra.mxu0 %v940
    %v1433 = vpop.f32.mrf.mxu0
    %v1434 = vadd.f32 %v1414, %v1433
    %1435 = vdwg.mxu0
    %1436 = vmatpush.msra.mxu0 %v1179
    %1437 = vmatpush.msra.mxu0 %v1178
    %1438 = vmatpush.msra.mxu0 %v1177
    %1439 = vmatpush.msra.mxu0 %v1176
    %1440 = vmatpush.msra.mxu0 %v1175
    %1441 = vmatpush.msra.mxu0 %v1174
    %1442 = vmatpush.msra.mxu0 %v1173
    %1443 = vmatpush.msra.mxu0 %v1172
    %1444 = vmatpush.msra.mxu0 %v1171
    %1445 = vmatpush.msra.mxu0 %v1170
    %1446 = vmatpush.msra.mxu0 %v1169
    %1447 = vmatpush.msra.mxu0 %v1168
    %1448 = vmatpush.msra.mxu0 %v1167
    %1449 = vmatpush.msra.mxu0 %v1166
    %1450 = vmatpush.msra.mxu0 %v1165
    %1451 = vmatpush.msra.mxu0 %v1164
    %1452 = vmatmul.f32.gmra.mxu0 %v990
    %v1453 = vpop.f32.mrf.mxu0
    %v1454 = vadd.f32 %v1434, %v1453
    %1455 = vdwg.mxu0
    %1456 = vmatpush.msra.mxu0 %v1195
    %1457 = vmatpush.msra.mxu0 %v1194
    %1458 = vmatpush.msra.mxu0 %v1193
    %1459 = vmatpush.msra.mxu0 %v1192
    %1460 = vmatpush.msra.mxu0 %v1191
    %1461 = vmatpush.msra.mxu0 %v1190
    %1462 = vmatpush.msra.mxu0 %v1189
    %1463 = vmatpush.msra.mxu0 %v1188
    %1464 = vmatpush.msra.mxu0 %v1187
    %1465 = vmatpush.msra.mxu0 %v1186
    %1466 = vmatpush.msra.mxu0 %v1185
    %1467 = vmatpush.msra.mxu0 %v1184
    %1468 = vmatpush.msra.mxu0 %v1183
    %1469 = vmatpush.msra.mxu0 %v1182
    %1470 = vmatpush.msra.mxu0 %v1181
    %1471 = vmatpush.msra.mxu0 %v1180
    %1472 = vmatmul.f32.gmra.mxu0 %v991
    %v1473 = vpop.f32.mrf.mxu0
    %v1474 = vadd.f32 %v1454, %v1473
    %1475 = vdwg.mxu0
    %1476 = vmatpush.msra.mxu0 %v1211
    %1477 = vmatpush.msra.mxu0 %v1210
    %1478 = vmatpush.msra.mxu0 %v1209
    %1479 = vmatpush.msra.mxu0 %v1208
    %1480 = vmatpush.msra.mxu0 %v1207
    %1481 = vmatpush.msra.mxu0 %v1206
    %1482 = vmatpush.msra.mxu0 %v1205
    %1483 = vmatpush.msra.mxu0 %v1204
    %1484 = vmatpush.msra.mxu0 %v1203
    %1485 = vmatpush.msra.mxu0 %v1202
    %1486 = vmatpush.msra.mxu0 %v1201
    %1487 = vmatpush.msra.mxu0 %v1200
    %1488 = vmatpush.msra.mxu0 %v1199
    %1489 = vmatpush.msra.mxu0 %v1198
    %1490 = vmatpush.msra.mxu0 %v1197
    %1491 = vmatpush.msra.mxu0 %v1196
    %1492 = vmatmul.f32.gmra.mxu0 %v992
    %v1493 = vpop.f32.mrf.mxu0
    %v1494 = vadd.f32 %v1474, %v1493
    %1495 = vdwg.mxu0
    %1496 = vmatpush.msra.mxu0 %v1227
    %1497 = vmatpush.msra.mxu0 %v1226
    %1498 = vmatpush.msra.mxu0 %v1225
    %1499 = vmatpush.msra.mxu0 %v1224
    %1500 = vmatpush.msra.mxu0 %v1223
    %1501 = vmatpush.msra.mxu0 %v1222
    %1502 = vmatpush.msra.mxu0 %v1221
    %1503 = vmatpush.msra.mxu0 %v1220
    %1504 = vmatpush.msra.mxu0 %v1219
    %1505 = vmatpush.msra.mxu0 %v1218
    %1506 = vmatpush.msra.mxu0 %v1217
    %1507 = vmatpush.msra.mxu0 %v1216
    %1508 = vmatpush.msra.mxu0 %v1215
    %1509 = vmatpush.msra.mxu0 %v1214
    %1510 = vmatpush.msra.mxu0 %v1213
    %1511 = vmatpush.msra.mxu0 %v1212
    %1512 = vmatmul.f32.gmra.mxu0 %v993
    %v1513 = vpop.f32.mrf.mxu0
    %v1514 = vadd.f32 %v1494, %v1513
    %1515 = vdwg.mxu0
    %1516 = vmatpush.msra.mxu0 %v1243
    %1517 = vmatpush.msra.mxu0 %v1242
    %1518 = vmatpush.msra.mxu0 %v1241
    %1519 = vmatpush.msra.mxu0 %v1240
    %1520 = vmatpush.msra.mxu0 %v1239
    %1521 = vmatpush.msra.mxu0 %v1238
    %1522 = vmatpush.msra.mxu0 %v1237
    %1523 = vmatpush.msra.mxu0 %v1236
    %1524 = vmatpush.msra.mxu0 %v1235
    %1525 = vmatpush.msra.mxu0 %v1234
    %1526 = vmatpush.msra.mxu0 %v1233
    %1527 = vmatpush.msra.mxu0 %v1232
    %1528 = vmatpush.msra.mxu0 %v1231
    %1529 = vmatpush.msra.mxu0 %v1230
    %1530 = vmatpush.msra.mxu0 %v1229
    %1531 = vmatpush.msra.mxu0 %v1228
    %1532 = vmatmul.f32.gmra.mxu0 %v1043
    %v1533 = vpop.f32.mrf.mxu0
    %v1534 = vadd.f32 %v1514, %v1533
    %1535 = vdwg.mxu0
    %1536 = vmatpush.msra.mxu0 %v1259
    %1537 = vmatpush.msra.mxu0 %v1258
    %1538 = vmatpush.msra.mxu0 %v1257
    %1539 = vmatpush.msra.mxu0 %v1256
    %1540 = vmatpush.msra.mxu0 %v1255
    %1541 = vmatpush.msra.mxu0 %v1254
    %1542 = vmatpush.msra.mxu0 %v1253
    %1543 = vmatpush.msra.mxu0 %v1252
    %1544 = vmatpush.msra.mxu0 %v1251
    %1545 = vmatpush.msra.mxu0 %v1250
    %1546 = vmatpush.msra.mxu0 %v1249
    %1547 = vmatpush.msra.mxu0 %v1248
    %1548 = vmatpush.msra.mxu0 %v1247
    %1549 = vmatpush.msra.mxu0 %v1246
    %1550 = vmatpush.msra.mxu0 %v1245
    %1551 = vmatpush.msra.mxu0 %v1244
    %1552 = vmatmul.f32.gmra.mxu0 %v1044
    %v1553 = vpop.f32.mrf.mxu0
    %v1554 = vadd.f32 %v1534, %v1553
    %1555 = vdwg.mxu0
    %1556 = vmatpush.msra.mxu0 %v1275
    %1557 = vmatpush.msra.mxu0 %v1274
    %1558 = vmatpush.msra.mxu0 %v1273
    %1559 = vmatpush.msra.mxu0 %v1272
    %1560 = vmatpush.msra.mxu0 %v1271
    %1561 = vmatpush.msra.mxu0 %v1270
    %1562 = vmatpush.msra.mxu0 %v1269
    %1563 = vmatpush.msra.mxu0 %v1268
    %1564 = vmatpush.msra.mxu0 %v1267
    %1565 = vmatpush.msra.mxu0 %v1266
    %1566 = vmatpush.msra.mxu0 %v1265
    %1567 = vmatpush.msra.mxu0 %v1264
    %1568 = vmatpush.msra.mxu0 %v1263
    %1569 = vmatpush.msra.mxu0 %v1262
    %1570 = vmatpush.msra.mxu0 %v1261
    %1571 = vmatpush.msra.mxu0 %v1260
    %1572 = vmatmul.f32.gmra.mxu0 %v1045
    %v1573 = vpop.f32.mrf.mxu0
    %v1574 = vadd.f32 %v1554, %v1573
    %1575 = vdwg.mxu0
    %1576 = vmatpush.msra.mxu0 %v1291
    %1577 = vmatpush.msra.mxu0 %v1290
    %1578 = vmatpush.msra.mxu0 %v1289
    %1579 = vmatpush.msra.mxu0 %v1288
    %1580 = vmatpush.msra.mxu0 %v1287
    %1581 = vmatpush.msra.mxu0 %v1286
    %1582 = vmatpush.msra.mxu0 %v1285
    %1583 = vmatpush.msra.mxu0 %v1284
    %1584 = vmatpush.msra.mxu0 %v1283
    %1585 = vmatpush.msra.mxu0 %v1282
    %1586 = vmatpush.msra.mxu0 %v1281
    %1587 = vmatpush.msra.mxu0 %v1280
    %1588 = vmatpush.msra.mxu0 %v1279
    %1589 = vmatpush.msra.mxu0 %v1278
    %1590 = vmatpush.msra.mxu0 %v1277
    %1591 = vmatpush.msra.mxu0 %v1276
    %1592 = vmatmul.f32.gmra.mxu0 %v1046
    %v1593 = vpop.f32.mrf.mxu0
    %v1594 = vadd.f32 %v1574, %v1593
    %1595 = vdwg.mxu0
    %1596 = vmatpush.msra.mxu0 %v1307
    %1597 = vmatpush.msra.mxu0 %v1306
    %1598 = vmatpush.msra.mxu0 %v1305
    %1599 = vmatpush.msra.mxu0 %v1304
    %1600 = vmatpush.msra.mxu0 %v1303
    %1601 = vmatpush.msra.mxu0 %v1302
    %1602 = vmatpush.msra.mxu0 %v1301
    %1603 = vmatpush.msra.mxu0 %v1300
    %1604 = vmatpush.msra.mxu0 %v1299
    %1605 = vmatpush.msra.mxu0 %v1298
    %1606 = vmatpush.msra.mxu0 %v1297
    %1607 = vmatpush.msra.mxu0 %v1296
    %1608 = vmatpush.msra.mxu0 %v1295
    %1609 = vmatpush.msra.mxu0 %v1294
    %1610 = vmatpush.msra.mxu0 %v1293
    %1611 = vmatpush.msra.mxu0 %v1292
    %1612 = vmatmul.f32.gmra.mxu0 %v1096
    %v1613 = vpop.f32.mrf.mxu0
    %v1614 = vadd.f32 %v1594, %v1613
    %1615 = vdwg.mxu0
    %1616 = vmatpush.msra.mxu0 %v1323
    %1617 = vmatpush.msra.mxu0 %v1322
    %1618 = vmatpush.msra.mxu0 %v1321
    %1619 = vmatpush.msra.mxu0 %v1320
    %1620 = vmatpush.msra.mxu0 %v1319
    %1621 = vmatpush.msra.mxu0 %v1318
    %1622 = vmatpush.msra.mxu0 %v1317
    %1623 = vmatpush.msra.mxu0 %v1316
    %1624 = vmatpush.msra.mxu0 %v1315
    %1625 = vmatpush.msra.mxu0 %v1314
    %1626 = vmatpush.msra.mxu0 %v1313
    %1627 = vmatpush.msra.mxu0 %v1312
    %1628 = vmatpush.msra.mxu0 %v1311
    %1629 = vmatpush.msra.mxu0 %v1310
    %1630 = vmatpush.msra.mxu0 %v1309
    %1631 = vmatpush.msra.mxu0 %v1308
    %1632 = vmatmul.f32.gmra.mxu0 %v1097
    %v1633 = vpop.f32.mrf.mxu0
    %v1634 = vadd.f32 %v1614, %v1633
    %1635 = vdwg.mxu0
    %1636 = vmatpush.msra.mxu0 %v1339
    %1637 = vmatpush.msra.mxu0 %v1338
    %1638 = vmatpush.msra.mxu0 %v1337
    %1639 = vmatpush.msra.mxu0 %v1336
    %1640 = vmatpush.msra.mxu0 %v1335
    %1641 = vmatpush.msra.mxu0 %v1334
    %1642 = vmatpush.msra.mxu0 %v1333
    %1643 = vmatpush.msra.mxu0 %v1332
    %1644 = vmatpush.msra.mxu0 %v1331
    %1645 = vmatpush.msra.mxu0 %v1330
    %1646 = vmatpush.msra.mxu0 %v1329
    %1647 = vmatpush.msra.mxu0 %v1328
    %1648 = vmatpush.msra.mxu0 %v1327
    %1649 = vmatpush.msra.mxu0 %v1326
    %1650 = vmatpush.msra.mxu0 %v1325
    %1651 = vmatpush.msra.mxu0 %v1324
    %1652 = vmatmul.f32.gmra.mxu0 %v1098
    %v1653 = vpop.f32.mrf.mxu0
    %v1654 = vadd.f32 %v1634, %v1653
    %1655 = vdwg.mxu0
    %1656 = vmatpush.msra.mxu0 %v1355
    %1657 = vmatpush.msra.mxu0 %v1354
    %1658 = vmatpush.msra.mxu0 %v1353
    %1659 = vmatpush.msra.mxu0 %v1352
    %1660 = vmatpush.msra.mxu0 %v1351
    %1661 = vmatpush.msra.mxu0 %v1350
    %1662 = vmatpush.msra.mxu0 %v1349
    %1663 = vmatpush.msra.mxu0 %v1348
    %1664 = vmatpush.msra.mxu0 %v1347
    %1665 = vmatpush.msra.mxu0 %v1346
    %1666 = vmatpush.msra.mxu0 %v1345
    %1667 = vmatpush.msra.mxu0 %v1344
    %1668 = vmatpush.msra.mxu0 %v1343
    %1669 = vmatpush.msra.mxu0 %v1342
    %1670 = vmatpush.msra.mxu0 %v1341
    %1671 = vmatpush.msra.mxu0 %v1340
    %1672 = vmatmul.f32.gmra.mxu0 %v1099
    %v1673 = vpop.f32.mrf.mxu0
    %v1674 = vadd.f32 %v1654, %v1673
    %1675 = vdwg.mxu0
    %v1676 = vsub.f32 %v1674, %v457
    %v1677 = vmul.f32 %v1676, %v1676
    %vm1678 = vcmask 254976
    %v1679 = vsel %vm1678, %v1677, 0.0
    %1680 = vadd.xlane.f32.xlu0 %v1679
    %v1681 = vpop.xlane.xlu0 %1680
    %vm1682 = vcmask 1024
    %1683 = vst.msk [vmem:[%s13] sm:$0x3] %vm1682, %v1681
    %v1684 = vld [vmem:[#allocation10] sm:$0xff]
    %v1685 = vld [vmem:[#allocation10 + $0x8] sm:$0xff]
    %v1686 = vld [vmem:[#allocation10 + $0x10] sm:$0xff]
    %v1687 = vld [vmem:[#allocation10 + $0x18] sm:$0xff]
    %v1688 = vld [vmem:[#allocation10 + $0x20] sm:$0xff]
    %v1689 = vld [vmem:[#allocation10 + $0x28] sm:$0xff]
    %v1690 = vld [vmem:[#allocation10 + $0x30] sm:$0xff]
    %v1691 = vld [vmem:[#allocation10 + $0x38] sm:$0xff]
    %v1692 = vld [vmem:[#allocation10 + $0x40] sm:$0xff]
    %v1693 = vld [vmem:[#allocation10 + $0x48] sm:$0xff]
    %v1694 = vld [vmem:[#allocation10 + $0x50] sm:$0xff]
    %v1695 = vld [vmem:[#allocation10 + $0x58] sm:$0xff]
    %v1696 = vld [vmem:[#allocation10 + $0x60] sm:$0xff]
    %v1697 = vld [vmem:[#allocation10 + $0x68] sm:$0xff]
    %v1698 = vld [vmem:[#allocation10 + $0x70] sm:$0xff]
    %v1699 = vld [vmem:[#allocation10 + $0x78] sm:$0xff]
    %v1700 = vld [vmem:[%s9] sm:$0xf]
    %v1702 = vperm.slane %v1700, 0
    %v1703 = vperm.slane %v1700, 1
    %v1704 = vperm.slane %v1700, 2
    %v1705 = vperm.slane %v1700, 3
    %v1711 = vsel %vm558, %v1674, 0
    %1713 = vmatpush.msra.mxu0 0.0
    %1714 = vmatpush.msra.mxu0 0.0
    %1715 = vmatpush.msra.mxu0 0.0
    %1716 = vmatpush.msra.mxu0 0.0
    %1717 = vmatpush.msra.mxu0 0.0
    %1718 = vmatpush.msra.mxu0 0.0
    %1719 = vmatpush.msra.mxu0 0.0
    %1720 = vmatpush.msra.mxu0 0.0
    %1721 = vmatpush.msra.mxu0 0.0
    %1722 = vmatpush.msra.mxu0 0.0
    %1723 = vmatpush.msra.mxu0 0.0
    %1724 = vmatpush.msra.mxu0 0.0
    %1725 = vmatpush.msra.mxu0 %v1696
    %1726 = vmatpush.msra.mxu0 %v1692
    %1727 = vmatpush.msra.mxu0 %v1688
    %1728 = vmatpush.msra.mxu0 %v1684
    %1729 = vmatmul.f32.gmra.mxu0 %v1711
    %v1730 = vpop.f32.mrf.mxu0
    %v1731 = vadd.f32 %v1702, %v1730
    %1732 = vdwg.mxu0
    %1733 = vmatpush.msra.mxu0 0.0
    %1734 = vmatpush.msra.mxu0 0.0
    %1735 = vmatpush.msra.mxu0 0.0
    %1736 = vmatpush.msra.mxu0 0.0
    %1737 = vmatpush.msra.mxu0 0.0
    %1738 = vmatpush.msra.mxu0 0.0
    %1739 = vmatpush.msra.mxu0 0.0
    %1740 = vmatpush.msra.mxu0 0.0
    %1741 = vmatpush.msra.mxu0 0.0
    %1742 = vmatpush.msra.mxu0 0.0
    %1743 = vmatpush.msra.mxu0 0.0
    %1744 = vmatpush.msra.mxu0 0.0
    %1745 = vmatpush.msra.mxu0 %v1697
    %1746 = vmatpush.msra.mxu0 %v1693
    %1747 = vmatpush.msra.mxu0 %v1689
    %1748 = vmatpush.msra.mxu0 %v1685
    %1749 = vmatmul.f32.gmra.mxu0 %v1711
    %v1750 = vpop.f32.mrf.mxu0
    %v1751 = vadd.f32 %v1703, %v1750
    %1752 = vdwg.mxu0
    %1753 = vmatpush.msra.mxu0 0.0
    %1754 = vmatpush.msra.mxu0 0.0
    %1755 = vmatpush.msra.mxu0 0.0
    %1756 = vmatpush.msra.mxu0 0.0
    %1757 = vmatpush.msra.mxu0 0.0
    %1758 = vmatpush.msra.mxu0 0.0
    %1759 = vmatpush.msra.mxu0 0.0
    %1760 = vmatpush.msra.mxu0 0.0
    %1761 = vmatpush.msra.mxu0 0.0
    %1762 = vmatpush.msra.mxu0 0.0
    %1763 = vmatpush.msra.mxu0 0.0
    %1764 = vmatpush.msra.mxu0 0.0
    %1765 = vmatpush.msra.mxu0 %v1698
    %1766 = vmatpush.msra.mxu0 %v1694
    %1767 = vmatpush.msra.mxu0 %v1690
    %1768 = vmatpush.msra.mxu0 %v1686
    %1769 = vmatmul.f32.gmra.mxu0 %v1711
    %v1770 = vpop.f32.mrf.mxu0
    %v1771 = vadd.f32 %v1704, %v1770
    %1772 = vdwg.mxu0
    %1773 = vmatpush.msra.mxu0 0.0
    %1774 = vmatpush.msra.mxu0 0.0
    %1775 = vmatpush.msra.mxu0 0.0
    %1776 = vmatpush.msra.mxu0 0.0
    %1777 = vmatpush.msra.mxu0 0.0
    %1778 = vmatpush.msra.mxu0 0.0
    %1779 = vmatpush.msra.mxu0 0.0
    %1780 = vmatpush.msra.mxu0 0.0
    %1781 = vmatpush.msra.mxu0 0.0
    %1782 = vmatpush.msra.mxu0 0.0
    %1783 = vmatpush.msra.mxu0 0.0
    %1784 = vmatpush.msra.mxu0 0.0
    %1785 = vmatpush.msra.mxu0 %v1699
    %1786 = vmatpush.msra.mxu0 %v1695
    %1787 = vmatpush.msra.mxu0 %v1691
    %1788 = vmatpush.msra.mxu0 %v1687
    %1789 = vmatmul.f32.gmra.mxu0 %v1711
    %v1790 = vpop.f32.mrf.mxu0
    %v1791 = vadd.f32 %v1705, %v1790
    %1792 = vdwg.mxu0
    %v1793 = vmax.f32 %v1731, 0.0
    %v1794 = vmax.f32 %v1751, 0.0
    %v1795 = vmax.f32 %v1771, 0.0
    %v1796 = vmax.f32 %v1791, 0.0
    %v1797 = vld [vmem:[#allocation12] sm:$0xff]
    %v1798 = vld [vmem:[#allocation12 + $0x8] sm:$0xff]
    %v1799 = vld [vmem:[#allocation12 + $0x10] sm:$0xff]
    %v1800 = vld [vmem:[#allocation12 + $0x18] sm:$0xff]
    %v1801 = vld [vmem:[#allocation12 + $0x20] sm:$0xff]
    %v1802 = vld [vmem:[#allocation12 + $0x28] sm:$0xff]
    %v1803 = vld [vmem:[#allocation12 + $0x30] sm:$0xff]
    %v1804 = vld [vmem:[#allocation12 + $0x38] sm:$0xff]
    %v1805 = vld [vmem:[#allocation12 + $0x40] sm:$0xff]
    %v1806 = vld [vmem:[#allocation12 + $0x48] sm:$0xff]
    %v1807 = vld [vmem:[#allocation12 + $0x50] sm:$0xff]
    %v1808 = vld [vmem:[#allocation12 + $0x58] sm:$0xff]
    %v1809 = vld [vmem:[#allocation12 + $0x60] sm:$0xff]
    %v1810 = vld [vmem:[#allocation12 + $0x68] sm:$0xff]
    %v1811 = vld [vmem:[#allocation12 + $0x70] sm:$0xff]
    %v1812 = vld [vmem:[#allocation12 + $0x78] sm:$0xff]
    %v1813 = vld [vmem:[#allocation12 + $0x80] sm:$0xff]
    %v1814 = vld [vmem:[#allocation12 + $0x88] sm:$0xff]
    %v1815 = vld [vmem:[#allocation12 + $0x90] sm:$0xff]
    %v1816 = vld [vmem:[#allocation12 + $0x98] sm:$0xff]
    %v1817 = vld [vmem:[#allocation12 + $0xa0] sm:$0xff]
    %v1818 = vld [vmem:[#allocation12 + $0xa8] sm:$0xff]
    %v1819 = vld [vmem:[#allocation12 + $0xb0] sm:$0xff]
    %v1820 = vld [vmem:[#allocation12 + $0xb8] sm:$0xff]
    %v1821 = vld [vmem:[#allocation12 + $0xc0] sm:$0xff]
    %v1822 = vld [vmem:[#allocation12 + $0xc8] sm:$0xff]
    %v1823 = vld [vmem:[#allocation12 + $0xd0] sm:$0xff]
    %v1824 = vld [vmem:[#allocation12 + $0xd8] sm:$0xff]
    %v1825 = vld [vmem:[#allocation12 + $0xe0] sm:$0xff]
    %v1826 = vld [vmem:[#allocation12 + $0xe8] sm:$0xff]
    %v1827 = vld [vmem:[#allocation12 + $0xf0] sm:$0xff]
    %v1828 = vld [vmem:[#allocation12 + $0xf8] sm:$0xff]
    %v1829 = vld [vmem:[#allocation12 + $0x100] sm:$0xff]
    %v1830 = vld [vmem:[#allocation12 + $0x108] sm:$0xff]
    %v1831 = vld [vmem:[#allocation12 + $0x110] sm:$0xff]
    %v1832 = vld [vmem:[#allocation12 + $0x118] sm:$0xff]
    %v1833 = vld [vmem:[#allocation12 + $0x120] sm:$0xff]
    %v1834 = vld [vmem:[#allocation12 + $0x128] sm:$0xff]
    %v1835 = vld [vmem:[#allocation12 + $0x130] sm:$0xff]
    %v1836 = vld [vmem:[#allocation12 + $0x138] sm:$0xff]
    %v1837 = vld [vmem:[#allocation12 + $0x140] sm:$0xff]
    %v1838 = vld [vmem:[#allocation12 + $0x148] sm:$0xff]
    %v1839 = vld [vmem:[#allocation12 + $0x150] sm:$0xff]
    %v1840 = vld [vmem:[#allocation12 + $0x158] sm:$0xff]
    %v1841 = vld [vmem:[#allocation12 + $0x160] sm:$0xff]
    %v1842 = vld [vmem:[#allocation12 + $0x168] sm:$0xff]
    %v1843 = vld [vmem:[#allocation12 + $0x170] sm:$0xff]
    %v1844 = vld [vmem:[#allocation12 + $0x178] sm:$0xff]
    %v1845 = vld [vmem:[#allocation12 + $0x180] sm:$0xff]
    %v1846 = vld [vmem:[#allocation12 + $0x188] sm:$0xff]
    %v1847 = vld [vmem:[#allocation12 + $0x190] sm:$0xff]
    %v1848 = vld [vmem:[#allocation12 + $0x198] sm:$0xff]
    %v1849 = vld [vmem:[#allocation12 + $0x1a0] sm:$0xff]
    %v1850 = vld [vmem:[#allocation12 + $0x1a8] sm:$0xff]
    %v1851 = vld [vmem:[#allocation12 + $0x1b0] sm:$0xff]
    %v1852 = vld [vmem:[#allocation12 + $0x1b8] sm:$0xff]
    %v1853 = vld [vmem:[#allocation12 + $0x1c0] sm:$0xff]
    %v1854 = vld [vmem:[#allocation12 + $0x1c8] sm:$0xff]
    %v1855 = vld [vmem:[#allocation12 + $0x1d0] sm:$0xff]
    %v1856 = vld [vmem:[#allocation12 + $0x1d8] sm:$0xff]
    %v1857 = vld [vmem:[#allocation12 + $0x1e0] sm:$0xff]
    %v1858 = vld [vmem:[#allocation12 + $0x1e8] sm:$0xff]
    %v1859 = vld [vmem:[#allocation12 + $0x1f0] sm:$0xff]
    %v1860 = vld [vmem:[#allocation12 + $0x1f8] sm:$0xff]
    %v1861 = vld [vmem:[%s11] sm:$0x1]
    %v1863 = vperm.slane %v1861, 0
    %1865 = vmatpush.msra.mxu0 %v1812
    %1866 = vmatpush.msra.mxu0 %v1811
    %1867 = vmatpush.msra.mxu0 %v1810
    %1868 = vmatpush.msra.mxu0 %v1809
    %1869 = vmatpush.msra.mxu0 %v1808
    %1870 = vmatpush.msra.mxu0 %v1807
    %1871 = vmatpush.msra.mxu0 %v1806
    %1872 = vmatpush.msra.mxu0 %v1805
    %1873 = vmatpush.msra.mxu0 %v1804
    %1874 = vmatpush.msra.mxu0 %v1803
    %1875 = vmatpush.msra.mxu0 %v1802
    %1876 = vmatpush.msra.mxu0 %v1801
    %1877 = vmatpush.msra.mxu0 %v1800
    %1878 = vmatpush.msra.mxu0 %v1799
    %1879 = vmatpush.msra.mxu0 %v1798
    %1880 = vmatpush.msra.mxu0 %v1797
    %1881 = vmatmul.f32.gmra.mxu0 %v1793
    %v1882 = vpop.f32.mrf.mxu0
    %v1883 = vadd.f32 %v1863, %v1882
    %1884 = vdwg.mxu0
    %1885 = vmatpush.msra.mxu0 %v1828
    %1886 = vmatpush.msra.mxu0 %v1827
    %1887 = vmatpush.msra.mxu0 %v1826
    %1888 = vmatpush.msra.mxu0 %v1825
    %1889 = vmatpush.msra.mxu0 %v1824
    %1890 = vmatpush.msra.mxu0 %v1823
    %1891 = vmatpush.msra.mxu0 %v1822
    %1892 = vmatpush.msra.mxu0 %v1821
    %1893 = vmatpush.msra.mxu0 %v1820
    %1894 = vmatpush.msra.mxu0 %v1819
    %1895 = vmatpush.msra.mxu0 %v1818
    %1896 = vmatpush.msra.mxu0 %v1817
    %1897 = vmatpush.msra.mxu0 %v1816
    %1898 = vmatpush.msra.mxu0 %v1815
    %1899 = vmatpush.msra.mxu0 %v1814
    %1900 = vmatpush.msra.mxu0 %v1813
    %1901 = vmatmul.f32.gmra.mxu0 %v1794
    %v1902 = vpop.f32.mrf.mxu0
    %v1903 = vadd.f32 %v1883, %v1902
    %1904 = vdwg.mxu0
    %1905 = vmatpush.msra.mxu0 %v1844
    %1906 = vmatpush.msra.mxu0 %v1843
    %1907 = vmatpush.msra.mxu0 %v1842
    %1908 = vmatpush.msra.mxu0 %v1841
    %1909 = vmatpush.msra.mxu0 %v1840
    %1910 = vmatpush.msra.mxu0 %v1839
    %1911 = vmatpush.msra.mxu0 %v1838
    %1912 = vmatpush.msra.mxu0 %v1837
    %1913 = vmatpush.msra.mxu0 %v1836
    %1914 = vmatpush.msra.mxu0 %v1835
    %1915 = vmatpush.msra.mxu0 %v1834
    %1916 = vmatpush.msra.mxu0 %v1833
    %1917 = vmatpush.msra.mxu0 %v1832
    %1918 = vmatpush.msra.mxu0 %v1831
    %1919 = vmatpush.msra.mxu0 %v1830
    %1920 = vmatpush.msra.mxu0 %v1829
    %1921 = vmatmul.f32.gmra.mxu0 %v1795
    %v1922 = vpop.f32.mrf.mxu0
    %v1923 = vadd.f32 %v1903, %v1922
    %1924 = vdwg.mxu0
    %1925 = vmatpush.msra.mxu0 %v1860
    %1926 = vmatpush.msra.mxu0 %v1859
    %1927 = vmatpush.msra.mxu0 %v1858
    %1928 = vmatpush.msra.mxu0 %v1857
    %1929 = vmatpush.msra.mxu0 %v1856
    %1930 = vmatpush.msra.mxu0 %v1855
    %1931 = vmatpush.msra.mxu0 %v1854
    %1932 = vmatpush.msra.mxu0 %v1853
    %1933 = vmatpush.msra.mxu0 %v1852
    %1934 = vmatpush.msra.mxu0 %v1851
    %1935 = vmatpush.msra.mxu0 %v1850
    %1936 = vmatpush.msra.mxu0 %v1849
    %1937 = vmatpush.msra.mxu0 %v1848
    %1938 = vmatpush.msra.mxu0 %v1847
    %1939 = vmatpush.msra.mxu0 %v1846
    %1940 = vmatpush.msra.mxu0 %v1845
    %1941 = vmatmul.f32.gmra.mxu0 %v1796
    %v1942 = vpop.f32.mrf.mxu0
    %v1943 = vadd.f32 %v1923, %v1942
    %1944 = vdwg.mxu0
    %1945 = vst [vmem:[%s12] sm:$0x3] %v1943
    // Predicated region
    $region78: #{_lambda_.1} parent=1 // pred_check
      _
    $region79: #{_lambda_.1} parent=1 // pred_check_branch
      %1947 = sbr.rel (0) target = $region81
    $region80: #{_lambda_.1} parent=1 // pred_region
      _
    $region81: #{_lambda_.1} parent=1 // pred_fallthru
      _
    // Predicated region
    $region82: #{_lambda_.1} parent=1 // pred_check
      _
    $region83: #{_lambda_.1} parent=1 // pred_check_branch
      %1949 = sbr.rel (0) target = $region85
    $region84: #{_lambda_.1} parent=1 // pred_region
      _
    $region85: #{_lambda_.1} parent=1 // pred_fallthru
      _
    // Predicated region
    $region86: #{_lambda_.1} parent=1 // pred_check
      _
    $region87: #{_lambda_.1} parent=1 // pred_check_branch
      %1951 = sbr.rel (0) target = $region89
    $region88: #{_lambda_.1} parent=1 // pred_region
      _
    $region89: #{_lambda_.1} parent=1 // pred_fallthru
      _
    // Predicated region
    $region90: #{_lambda_.1} parent=1 // pred_check
      _
    $region91: #{_lambda_.1} parent=1 // pred_check_branch
      %1953 = sbr.rel (0) target = $region93
    $region92: #{_lambda_.1} parent=1 // pred_region
      _
    $region93: #{_lambda_.1} parent=1 // pred_fallthru
      _
    %1954 = vsyncpa [#allocation3], 1
    %1955 = vsyncpa [#allocation5], 1
    %1956 = vsyncpa [#allocation8], 1
    %1957 = vsyncpa [#allocation11], 1

</llo_original>
